<compile_context>
chip_gen: v7x
topology: tpu7x:2x2x1
jax: 0.10.0
libtpu: 0.0.40
codegen_flags: <defaults>
</compile_context>

<pallas_src>
import jax
import jax.numpy as jnp
from jax import lax
from jax.experimental import pallas as pl
from jax.experimental.pallas import tpu as pltpu


_VMEM_LIMIT = 32 * 1024 * 1024  # explicit, deterministic across v5e/v6e/v7x


# ---------------------------------------------------------------------------
# Small tiling helpers
# ---------------------------------------------------------------------------

def _round_up(x, m):
    return (x + m - 1) // m * m


def _tile_and_pad(dim, target):
    """Pick (tile, padded_dim) for one dimension.

    Small dims use a single full-extent block (always layout-legal); large dims
    use `target` (a multiple of 8/128 as appropriate) and pad up to a multiple.
    """
    if dim <= target:
        return dim, dim
    return target, _round_up(dim, target)


def _pad2d(a, rows, cols):
    r, c = a.shape
    if (r, c) == (rows, cols):
        return a
    return jnp.pad(a, ((0, rows - r), (0, cols - c)))


def _pad_axis1(a, length):
    if a.shape[1] == length:
        return a
    return jnp.pad(a, ((0, 0), (0, length - a.shape[1]), (0, 0)))


# ---------------------------------------------------------------------------
# Tiled linear-projection kernels (f32 accumulator, bf16 MXU operands)
# ---------------------------------------------------------------------------

def _linear_kernel(x_ref, w_ref, o_ref, acc_ref):
    @pl.when(pl.program_id(2) == 0)
    def _():
        acc_ref[...] = jnp.zeros_like(acc_ref)

    acc_ref[...] += jnp.dot(x_ref[...], w_ref[...],
                            preferred_element_type=jnp.float32)

    @pl.when(pl.program_id(2) == pl.num_programs(2) - 1)
    def _():
        o_ref[...] = acc_ref[...].astype(o_ref.dtype)


def _linear_bias_kernel(x_ref, w_ref, b_ref, o_ref, acc_ref):
    @pl.when(pl.program_id(2) == 0)
    def _():
        acc_ref[...] = jnp.zeros_like(acc_ref)

    acc_ref[...] += jnp.dot(x_ref[...], w_ref[...],
                            preferred_element_type=jnp.float32)

    @pl.when(pl.program_id(2) == pl.num_programs(2) - 1)
    def _():
        o_ref[...] = (acc_ref[...] + b_ref[...]).astype(o_ref.dtype)


def _kv_proj_kernel(x_ref, wk_ref, wv_ref, k_ref, v_ref, acck_ref, accv_ref):
    # Fused K/V projection: one read of the context tile feeds both matmuls.
    @pl.when(pl.program_id(2) == 0)
    def _():
        acck_ref[...] = jnp.zeros_like(acck_ref)
        accv_ref[...] = jnp.zeros_like(accv_ref)

    x = x_ref[...]
    acck_ref[...] += jnp.dot(x, wk_ref[...], preferred_element_type=jnp.float32)
    accv_ref[...] += jnp.dot(x, wv_ref[...], preferred_element_type=jnp.float32)

    @pl.when(pl.program_id(2) == pl.num_programs(2) - 1)
    def _():
        k_ref[...] = acck_ref[...].astype(k_ref.dtype)
        v_ref[...] = accv_ref[...].astype(v_ref.dtype)


def pallas_linear(x2d, w, b=None, *, out_dtype=None, compute_dtype=jnp.bfloat16,
                  tm=256, tn=256, tk=512):
    """y = x2d @ w (+ b).  x2d: (R, Cin), w: (Cin, Cout), b: (Cout,) or None."""
    R, Cin = x2d.shape
    Cout = w.shape[1]
    out_dtype = x2d.dtype if out_dtype is None else out_dtype

    tm, Rp = _tile_and_pad(R, tm)
    tn, Cop = _tile_and_pad(Cout, tn)
    tk, Cip = _tile_and_pad(Cin, tk)

    xb = _pad2d(x2d.astype(compute_dtype), Rp, Cip)
    wb = _pad2d(w.astype(compute_dtype), Cip, Cop)

    grid = (Rp // tm, Cop // tn, Cip // tk)
    common = dict(
        out_shape=jax.ShapeDtypeStruct((Rp, Cop), out_dtype),
        grid=grid,
        out_specs=pl.BlockSpec((tm, tn), lambda i, j, k: (i, j)),
        scratch_shapes=[pltpu.VMEM((tm, tn), jnp.float32)],
        compiler_params=pltpu.CompilerParams(
            dimension_semantics=("parallel", "parallel", "arbitrary"),
            vmem_limit_bytes=_VMEM_LIMIT),
    )
    x_spec = pl.BlockSpec((tm, tk), lambda i, j, k: (i, k))
    w_spec = pl.BlockSpec((tk, tn), lambda i, j, k: (k, j))

    if b is None:
        out = pl.pallas_call(_linear_kernel, in_specs=[x_spec, w_spec],
                             **common)(xb, wb)
    else:
        bb = _pad2d(b.reshape(1, Cout).astype(jnp.float32), 1, Cop)
        b_spec = pl.BlockSpec((1, tn), lambda i, j, k: (0, j))
        out = pl.pallas_call(_linear_bias_kernel, in_specs=[x_spec, w_spec, b_spec],
                             **common)(xb, wb, bb)

    if (Rp, Cop) != (R, Cout):
        out = out[:R, :Cout]
    return out


def pallas_kv_proj(ctx2d, w_k, w_v, *, out_dtype=jnp.bfloat16,
                   compute_dtype=jnp.bfloat16, tm=256, tn=256, tk=512):
    """k, v = ctx2d @ w_k, ctx2d @ w_v with a single fused kernel."""
    R, Cin = ctx2d.shape
    inner = w_k.shape[1]

    tm, Rp = _tile_and_pad(R, tm)
    tn, Ip = _tile_and_pad(inner, tn)
    tk, Cip = _tile_and_pad(Cin, tk)

    xb = _pad2d(ctx2d.astype(compute_dtype), Rp, Cip)
    wkb = _pad2d(w_k.astype(compute_dtype), Cip, Ip)
    wvb = _pad2d(w_v.astype(compute_dtype), Cip, Ip)

    k2d, v2d = pl.pallas_call(
        _kv_proj_kernel,
        out_shape=(jax.ShapeDtypeStruct((Rp, Ip), out_dtype),
                   jax.ShapeDtypeStruct((Rp, Ip), out_dtype)),
        grid=(Rp // tm, Ip // tn, Cip // tk),
        in_specs=[pl.BlockSpec((tm, tk), lambda i, j, k: (i, k)),
                  pl.BlockSpec((tk, tn), lambda i, j, k: (k, j)),
                  pl.BlockSpec((tk, tn), lambda i, j, k: (k, j))],
        out_specs=(pl.BlockSpec((tm, tn), lambda i, j, k: (i, j)),
                   pl.BlockSpec((tm, tn), lambda i, j, k: (i, j))),
        scratch_shapes=[pltpu.VMEM((tm, tn), jnp.float32),
                        pltpu.VMEM((tm, tn), jnp.float32)],
        compiler_params=pltpu.CompilerParams(
            dimension_semantics=("parallel", "parallel", "arbitrary"),
            vmem_limit_bytes=_VMEM_LIMIT),
    )(xb, wkb, wvb)

    if (Rp, Ip) != (R, inner):
        k2d = k2d[:R, :inner]
        v2d = v2d[:R, :inner]
    return k2d, v2d


# ---------------------------------------------------------------------------
# Attention core: flash-style online softmax, all heads per step, lane-dense out
# ---------------------------------------------------------------------------

def _make_attn_kernel(heads, dim_head, tn_blk, tm_blk, m_true, m_padded):
    D = dim_head
    needs_mask = (m_padded != m_true)  # static: mask zero-padded KV columns

    def kernel(q_ref, k_ref, v_ref, o_ref, m_sc, l_sc, acc_sc):
        kv = pl.program_id(2)

        @pl.when(kv == 0)
        def _init():
            m_sc[...] = jnp.full_like(m_sc, -jnp.inf)
            l_sc[...] = jnp.zeros_like(l_sc)
            acc_sc[...] = jnp.zeros_like(acc_sc)

        q = q_ref[0]   # (TN, H*D) bf16 — softmax scale already folded into Wq
        k = k_ref[0]   # (TM, H*D) bf16
        v = v_ref[0]   # (TM, H*D) bf16

        if needs_mask:
            col = kv * tm_blk + lax.broadcasted_iota(
                jnp.int32, (tn_blk, tm_blk), 1)
            valid = col < m_true

        for h in range(heads):
            sl = slice(h * D, (h + 1) * D)
            qh, kh, vh = q[:, sl], k[:, sl], v[:, sl]

            # (TN, D) x (TM, D) -> (TN, TM): contract minor dims directly.
            s = lax.dot_general(qh, kh, (((1,), (1,)), ((), ())),
                                preferred_element_type=jnp.float32)
            if needs_mask:
                s = jnp.where(valid, s, -jnp.inf)

            m_prev = m_sc[h]                                   # (TN, 1) f32
            m_new = jnp.maximum(m_prev, jnp.max(s, axis=-1, keepdims=True))
            alpha = jnp.exp(m_prev - m_new)
            p = jnp.exp(s - m_new)                             # (TN, TM) f32
            l_sc[h] = alpha * l_sc[h] + jnp.sum(p, axis=-1, keepdims=True)
            pv = lax.dot_general(p.astype(vh.dtype), vh,
                                 (((1,), (0,)), ((), ())),
                                 preferred_element_type=jnp.float32)
            acc_sc[h] = alpha * acc_sc[h] + pv
            m_sc[h] = m_new

        @pl.when(kv == pl.num_programs(2) - 1)
        def _finalize():
            for h in range(heads):
                inv_l = pl.reciprocal(l_sc[h], approx=True)
                o_ref[0, :, h * D:(h + 1) * D] = (
                    acc_sc[h] * inv_l).astype(o_ref.dtype)

    return kernel


def pallas_attention_core(q, k, v, *, heads, dim_head, tn=256, tm=512):
    """q: (B, N, H*D), k/v: (B, M, H*D)  ->  (B, N, H*D), same layout."""
    B, N, HD = q.shape
    M = k.shape[1]
    assert HD == heads * dim_head

    TN, Np = _tile_and_pad(N, tn)
    TM, Mp = _tile_and_pad(M, tm)

    qp = _pad_axis1(q, Np)
    kp = _pad_axis1(k, Mp)
    vp = _pad_axis1(v, Mp)

    kernel = _make_attn_kernel(heads, dim_head, TN, TM, M, Mp)
    out = pl.pallas_call(
        kernel,
        out_shape=jax.ShapeDtypeStruct((B, Np, HD), q.dtype),
        grid=(B, Np // TN, Mp // TM),
        in_specs=[pl.BlockSpec((1, TN, HD), lambda b, n, m: (b, n, 0)),
                  pl.BlockSpec((1, TM, HD), lambda b, n, m: (b, m, 0)),
                  pl.BlockSpec((1, TM, HD), lambda b, n, m: (b, m, 0))],
        out_specs=pl.BlockSpec((1, TN, HD), lambda b, n, m: (b, n, 0)),
        scratch_shapes=[pltpu.VMEM((heads, TN, 1), jnp.float32),        # m
                        pltpu.VMEM((heads, TN, 1), jnp.float32),        # l
                        pltpu.VMEM((heads, TN, dim_head), jnp.float32)],  # acc
        compiler_params=pltpu.CompilerParams(
            dimension_semantics=("parallel", "parallel", "arbitrary"),
            vmem_limit_bytes=_VMEM_LIMIT),
    )(qp, kp, vp)

    if Np != N:
        out = out[:, :N, :]
    return out


# ---------------------------------------------------------------------------
# Attention module (forward pass)
# ---------------------------------------------------------------------------

class AttentionParams:
    def __init__(self, key, query_dim, context_dim=None, heads=8, dim_head=64):
        context_dim = query_dim if context_dim is None else context_dim
        inner_dim = dim_head * heads
        self.heads = heads
        self.dim_head = dim_head
        self.scale = dim_head ** (-0.5)
        k1, k2, k3, k4 = jax.random.split(key, 4)
        # Stored already transposed: (in, out), so y = x @ W
        self.w_q = (jax.random.normal(k1, (query_dim, inner_dim), jnp.float32)
                    * (query_dim ** -0.5))
        self.w_kv = (jax.random.normal(k2, (context_dim, 2 * inner_dim), jnp.float32)
                     * (context_dim ** -0.5))
        self.w_out = (jax.random.normal(k3, (inner_dim, query_dim), jnp.float32)
                      * (inner_dim ** -0.5))
        self.b_out = jax.random.normal(k4, (query_dim,), jnp.float32) * 0.01


def attention_forward(params, x, context=None, mask=None):
    # TODO(synk): mask path (masked_fill with padding mask) not implemented.
    # dropout=0.0 -> identity (eval semantics).
    assert mask is None
    h, d = params.heads, params.dim_head
    inner = h * d
    B, N, _ = x.shape
    ctx = x if context is None else context
    M = ctx.shape[1]
    cd = jnp.bfloat16

    xb = x.astype(cd)
    cb = ctx.astype(cd)

    # Fold the softmax scale into the q-projection weight (weight-sized op only).
    wq = params.w_q * params.scale
    wk = params.w_kv[:, :inner]   # weight-sized slices only (no activation slice)
    wv = params.w_kv[:, inner:]

    q = pallas_linear(xb.reshape(B * N, -1), wq, out_dtype=cd).reshape(B, N, inner)
    k2d, v2d = pallas_kv_proj(cb.reshape(B * M, -1), wk, wv, out_dtype=cd)
    k = k2d.reshape(B, M, inner)
    v = v2d.reshape(B, M, inner)

    # (B, N, h*d) lane-dense layout end-to-end; heads handled inside the kernel.
    out = pallas_attention_core(q, k, v, heads=h, dim_head=d)

    y = pallas_linear(out.reshape(B * N, inner), params.w_out, params.b_out,
                      out_dtype=x.dtype)
    return y.reshape(B, N, -1)


# ---------------------------------------------------------------------------
# References for sanity checks
# ---------------------------------------------------------------------------

def attention_reference_f32(params, x, context=None):
    """Exact module semantics in f32."""
    h, d = params.heads, params.dim_head
    inner = h * d
    B, N, _ = x.shape
    ctx = x if context is None else context
    M = ctx.shape[1]
    q = x @ params.w_q
    kv = ctx @ params.w_kv
    k, v = kv[..., :inner], kv[..., inner:]

    def split(t, L):
        return t.reshape(B, L, h, d).transpose(0, 2, 1, 3)

    qh, kh, vh = split(q, N), split(k, M), split(v, M)
    sim = jnp.einsum('bhid,bhjd->bhij', qh, kh) * params.scale
    attn = jax.nn.softmax(sim, axis=-1)
    out = jnp.einsum('bhij,bhjd->bhid', attn, vh)
    out = out.transpose(0, 2, 1, 3).reshape(B, N, inner)
    return out @ params.w_out + params.b_out


def attention_reference_bf16(params, x, context=None):
    """Reference with the same bf16-operand / f32-accumulate boundaries."""
    cd = jnp.bfloat16
    h, d = params.heads, params.dim_head
    inner = h * d
    B, N, _ = x.shape
    ctx = x if context is None else context
    M = ctx.shape[1]
    xb, cb = x.astype(cd), ctx.astype(cd)
    wq = (params.w_q * params.scale).astype(cd)
    wk = params.w_kv[:, :inner].astype(cd)
    wv = params.w_kv[:, inner:].astype(cd)

    q = jnp.dot(xb, wq, preferred_element_type=jnp.float32).astype(cd)
    k = jnp.dot(cb, wk, preferred_element_type=jnp.float32).astype(cd)
    v = jnp.dot(cb, wv, preferred_element_type=jnp.float32).astype(cd)

    def split(t, L):
        return t.reshape(B, L, h, d).transpose(0, 2, 1, 3)

    qh, kh, vh = split(q, N), split(k, M), split(v, M)
    sim = jnp.einsum('bhid,bhjd->bhij', qh, kh,
                     preferred_element_type=jnp.float32)
    attn = jax.nn.softmax(sim, axis=-1)
    out = jnp.einsum('bhij,bhjd->bhid', attn.astype(cd), vh,
                     preferred_element_type=jnp.float32).astype(cd)
    out = out.transpose(0, 2, 1, 3).reshape(B, N, inner)
    y = jnp.dot(out, params.w_out.astype(cd),
                preferred_element_type=jnp.float32) + params.b_out
    return y


# ---------------------------------------------------------------------------

if __name__ == "__main__":
    key = jax.random.PRNGKey(0)
    k_params, k_x, k_ctx = jax.random.split(key, 3)

    B, N, M = 2, 8, 8
    query_dim, context_dim = 32, 32
    heads, dim_head = 2, 16

    params = AttentionParams(k_params, query_dim, context_dim, heads, dim_head)
    x = jax.random.normal(k_x, (B, N, query_dim), jnp.float32)
    context = jax.random.normal(k_ctx, (B, M, context_dim), jnp.float32)

    fwd_cross = jax.jit(lambda a, c: attention_forward(params, a, c))
    fwd_self = jax.jit(lambda a: attention_forward(params, a))

    out = jax.block_until_ready(fwd_cross(x, context))
    assert out.shape == (B, N, query_dim)
    assert out.dtype == x.dtype

    ref_b = attention_reference_bf16(params, x, context)
    ref_f = attention_reference_f32(params, x, context)
    assert jnp.allclose(out, ref_b, atol=3e-2, rtol=3e-2), "mismatch vs bf16 reference"
    assert jnp.allclose(out, ref_f, atol=1e-1, rtol=1e-1), "mismatch vs f32 reference"

    out_self = jax.block_until_ready(fwd_self(x))
    ref_self = attention_reference_bf16(params, x)
    assert jnp.allclose(out_self, ref_self, atol=3e-2, rtol=3e-2), \
        "mismatch vs bf16 reference (self-attention)"

    print("KERNEL_OK")
</pallas_src>

<mosaic_0001>
module attributes {stable_mosaic.version = 11 : i64} {
  func.func @_kv_proj_kernel(%arg0: i32, %arg1: i32, %arg2: i32, %arg3: memref<16x32xbf16, #tpu.memory_space<vmem>>, %arg4: memref<32x32xbf16, #tpu.memory_space<vmem>>, %arg5: memref<32x32xbf16, #tpu.memory_space<vmem>>, %arg6: memref<16x32xbf16, #tpu.memory_space<vmem>>, %arg7: memref<16x32xbf16, #tpu.memory_space<vmem>>, %arg8: memref<16x32xf32, #tpu.memory_space<vmem>>, %arg9: memref<16x32xf32, #tpu.memory_space<vmem>>) attributes {dimension_semantics = [#tpu.dimension_semantics<parallel>, #tpu.dimension_semantics<parallel>, #tpu.dimension_semantics<arbitrary>], iteration_bounds = array<i64: 1, 1, 1>, scalar_prefetch = 0 : i64, scratch_operands = 2 : i64, tpu.core_type = #tpu.core_type<tc>, window_params = [{transform_indices = @transform_0, window_bounds = array<i64: 16, 32>}, {transform_indices = @transform_1, window_bounds = array<i64: 32, 32>}, {transform_indices = @transform_2, window_bounds = array<i64: 32, 32>}, {transform_indices = @transform_3, window_bounds = array<i64: 16, 32>}, {transform_indices = @transform_4, window_bounds = array<i64: 16, 32>}]} {
    %c0_i32 = arith.constant 0 : i32
    %0 = arith.cmpi eq, %arg2, %c0_i32 : i32
    %1 = arith.extui %0 : i1 to i32
    %c0_i32_0 = arith.constant 0 : i32
    %2 = arith.cmpi ne, %1, %c0_i32_0 : i32
    scf.if %2 {
      %cst_17 = arith.constant 0.000000e+00 : f32
      %17 = vector.broadcast %cst_17 : f32 to vector<16x32xf32>
      %c0_18 = arith.constant 0 : index
      %c0_19 = arith.constant 0 : index
      %18 = vector.load %arg8[%c0_18, %c0_19] : memref<16x32xf32, #tpu.memory_space<vmem>>, vector<16x32xf32>
      tpu.vector_store %arg8[%c0_18, %c0_19], %17 {strides = array<i32>} : memref<16x32xf32, #tpu.memory_space<vmem>>, vector<16x32xf32>,
      %cst_20 = arith.constant 0.000000e+00 : f32
      %19 = vector.broadcast %cst_20 : f32 to vector<16x32xf32>
      %c0_21 = arith.constant 0 : index
      %c0_22 = arith.constant 0 : index
      %20 = vector.load %arg9[%c0_21, %c0_22] : memref<16x32xf32, #tpu.memory_space<vmem>>, vector<16x32xf32>
      tpu.vector_store %arg9[%c0_21, %c0_22], %19 {strides = array<i32>} : memref<16x32xf32, #tpu.memory_space<vmem>>, vector<16x32xf32>,
    } else {
    }
    %c0 = arith.constant 0 : index
    %c0_1 = arith.constant 0 : index
    %3 = vector.load %arg3[%c0, %c0_1] : memref<16x32xbf16, #tpu.memory_space<vmem>>, vector<16x32xbf16>
    %c0_2 = arith.constant 0 : index
    %c0_3 = arith.constant 0 : index
    %4 = vector.load %arg8[%c0_2, %c0_3] : memref<16x32xf32, #tpu.memory_space<vmem>>, vector<16x32xf32>
    %c0_4 = arith.constant 0 : index
    %c0_5 = arith.constant 0 : index
    %5 = vector.load %arg4[%c0_4, %c0_5] : memref<32x32xbf16, #tpu.memory_space<vmem>>, vector<32x32xbf16>
    %cst = arith.constant dense<0.000000e+00> : vector<16x32xf32>
    %6 = tpu.matmul %3, %5, %cst {dimension_numbers = #tpu.dot_dimension_numbers<[1], [0], [0], [1], [0, 0, 1, 1], [], []>} : vector<16x32xbf16>, vector<32x32xbf16>, vector<16x32xf32> -> vector<16x32xf32>
    %7 = arith.addf %4, %6 : vector<16x32xf32>
    %c0_6 = arith.constant 0 : index
    %c0_7 = arith.constant 0 : index
    %8 = vector.load %arg8[%c0_6, %c0_7] : memref<16x32xf32, #tpu.memory_space<vmem>>, vector<16x32xf32>
    tpu.vector_store %arg8[%c0_6, %c0_7], %7 {strides = array<i32>} : memref<16x32xf32, #tpu.memory_space<vmem>>, vector<16x32xf32>,
    %c0_8 = arith.constant 0 : index
    %c0_9 = arith.constant 0 : index
    %9 = vector.load %arg9[%c0_8, %c0_9] : memref<16x32xf32, #tpu.memory_space<vmem>>, vector<16x32xf32>
    %c0_10 = arith.constant 0 : index
    %c0_11 = arith.constant 0 : index
    %10 = vector.load %arg5[%c0_10, %c0_11] : memref<32x32xbf16, #tpu.memory_space<vmem>>, vector<32x32xbf16>
    %cst_12 = arith.constant dense<0.000000e+00> : vector<16x32xf32>
    %11 = tpu.matmul %3, %10, %cst_12 {dimension_numbers = #tpu.dot_dimension_numbers<[1], [0], [0], [1], [0, 0, 1, 1], [], []>} : vector<16x32xbf16>, vector<32x32xbf16>, vector<16x32xf32> -> vector<16x32xf32>
    %12 = arith.addf %9, %11 : vector<16x32xf32>
    %c0_13 = arith.constant 0 : index
    %c0_14 = arith.constant 0 : index
    %13 = vector.load %arg9[%c0_13, %c0_14] : memref<16x32xf32, #tpu.memory_space<vmem>>, vector<16x32xf32>
    tpu.vector_store %arg9[%c0_13, %c0_14], %12 {strides = array<i32>} : memref<16x32xf32, #tpu.memory_space<vmem>>, vector<16x32xf32>,
    %c0_i32_15 = arith.constant 0 : i32
    %14 = arith.cmpi eq, %arg2, %c0_i32_15 : i32
    %15 = arith.extui %14 : i1 to i32
    %c0_i32_16 = arith.constant 0 : i32
    %16 = arith.cmpi ne, %15, %c0_i32_16 : i32
    scf.if %16 {
      %c0_17 = arith.constant 0 : index
      %c0_18 = arith.constant 0 : index
      %17 = vector.load %arg8[%c0_17, %c0_18] : memref<16x32xf32, #tpu.memory_space<vmem>>, vector<16x32xf32>
      %18 = arith.truncf %17 : vector<16x32xf32> to vector<16x32xbf16>
      %c0_19 = arith.constant 0 : index
      %c0_20 = arith.constant 0 : index
      %19 = vector.load %arg6[%c0_19, %c0_20] : memref<16x32xbf16, #tpu.memory_space<vmem>>, vector<16x32xbf16>
      tpu.vector_store %arg6[%c0_19, %c0_20], %18 {strides = array<i32>} : memref<16x32xbf16, #tpu.memory_space<vmem>>, vector<16x32xbf16>,
      %c0_21 = arith.constant 0 : index
      %c0_22 = arith.constant 0 : index
      %20 = vector.load %arg9[%c0_21, %c0_22] : memref<16x32xf32, #tpu.memory_space<vmem>>, vector<16x32xf32>
      %21 = arith.truncf %20 : vector<16x32xf32> to vector<16x32xbf16>
      %c0_23 = arith.constant 0 : index
      %c0_24 = arith.constant 0 : index
      %22 = vector.load %arg7[%c0_23, %c0_24] : memref<16x32xbf16, #tpu.memory_space<vmem>>, vector<16x32xbf16>
      tpu.vector_store %arg7[%c0_23, %c0_24], %21 {strides = array<i32>} : memref<16x32xbf16, #tpu.memory_space<vmem>>, vector<16x32xbf16>,
    } else {
    }
    return
  }
  func.func @transform_0(%arg0: i32, %arg1: i32, %arg2: i32) -> (i32, i32) {
    %c0_i32 = arith.constant 0 : i32
    return %arg0, %arg2 : i32, i32
  }
  func.func @transform_1(%arg0: i32, %arg1: i32, %arg2: i32) -> (i32, i32) {
    %c0_i32 = arith.constant 0 : i32
    return %arg2, %arg1 : i32, i32
  }
  func.func @transform_2(%arg0: i32, %arg1: i32, %arg2: i32) -> (i32, i32) {
    %c0_i32 = arith.constant 0 : i32
    return %arg2, %arg1 : i32, i32
  }
  func.func @transform_3(%arg0: i32, %arg1: i32, %arg2: i32) -> (i32, i32) {
    %c0_i32 = arith.constant 0 : i32
    return %arg0, %arg1 : i32, i32
  }
  func.func @transform_4(%arg0: i32, %arg1: i32, %arg2: i32) -> (i32, i32) {
    %c0_i32 = arith.constant 0 : i32
    return %arg0, %arg1 : i32, i32
  }
}

module attributes {stable_mosaic.version = 11 : i64} {
  func.func @_linear_kernel(%arg0: i32, %arg1: i32, %arg2: i32, %arg3: memref<16x32xbf16, #tpu.memory_space<vmem>>, %arg4: memref<32x32xbf16, #tpu.memory_space<vmem>>, %arg5: memref<16x32xbf16, #tpu.memory_space<vmem>>, %arg6: memref<16x32xf32, #tpu.memory_space<vmem>>) attributes {dimension_semantics = [#tpu.dimension_semantics<parallel>, #tpu.dimension_semantics<parallel>, #tpu.dimension_semantics<arbitrary>], iteration_bounds = array<i64: 1, 1, 1>, scalar_prefetch = 0 : i64, scratch_operands = 1 : i64, tpu.core_type = #tpu.core_type<tc>, window_params = [{transform_indices = @transform_0, window_bounds = array<i64: 16, 32>}, {transform_indices = @transform_1, window_bounds = array<i64: 32, 32>}, {transform_indices = @transform_2, window_bounds = array<i64: 16, 32>}]} {
    %c0_i32 = arith.constant 0 : i32
    %0 = arith.cmpi eq, %arg2, %c0_i32 : i32
    %1 = arith.extui %0 : i1 to i32
    %c0_i32_0 = arith.constant 0 : i32
    %2 = arith.cmpi ne, %1, %c0_i32_0 : i32
    scf.if %2 {
      %cst_10 = arith.constant 0.000000e+00 : f32
      %12 = vector.broadcast %cst_10 : f32 to vector<16x32xf32>
      %c0_11 = arith.constant 0 : index
      %c0_12 = arith.constant 0 : index
      %13 = vector.load %arg6[%c0_11, %c0_12] : memref<16x32xf32, #tpu.memory_space<vmem>>, vector<16x32xf32>
      tpu.vector_store %arg6[%c0_11, %c0_12], %12 {strides = array<i32>} : memref<16x32xf32, #tpu.memory_space<vmem>>, vector<16x32xf32>,
    } else {
    }
    %c0 = arith.constant 0 : index
    %c0_1 = arith.constant 0 : index
    %3 = vector.load %arg6[%c0, %c0_1] : memref<16x32xf32, #tpu.memory_space<vmem>>, vector<16x32xf32>
    %c0_2 = arith.constant 0 : index
    %c0_3 = arith.constant 0 : index
    %4 = vector.load %arg3[%c0_2, %c0_3] : memref<16x32xbf16, #tpu.memory_space<vmem>>, vector<16x32xbf16>
    %c0_4 = arith.constant 0 : index
    %c0_5 = arith.constant 0 : index
    %5 = vector.load %arg4[%c0_4, %c0_5] : memref<32x32xbf16, #tpu.memory_space<vmem>>, vector<32x32xbf16>
    %cst = arith.constant dense<0.000000e+00> : vector<16x32xf32>
    %6 = tpu.matmul %4, %5, %cst {dimension_numbers = #tpu.dot_dimension_numbers<[1], [0], [0], [1], [0, 0, 1, 1], [], []>} : vector<16x32xbf16>, vector<32x32xbf16>, vector<16x32xf32> -> vector<16x32xf32>
    %7 = arith.addf %3, %6 : vector<16x32xf32>
    %c0_6 = arith.constant 0 : index
    %c0_7 = arith.constant 0 : index
    %8 = vector.load %arg6[%c0_6, %c0_7] : memref<16x32xf32, #tpu.memory_space<vmem>>, vector<16x32xf32>
    tpu.vector_store %arg6[%c0_6, %c0_7], %7 {strides = array<i32>} : memref<16x32xf32, #tpu.memory_space<vmem>>, vector<16x32xf32>,
    %c0_i32_8 = arith.constant 0 : i32
    %9 = arith.cmpi eq, %arg2, %c0_i32_8 : i32
    %10 = arith.extui %9 : i1 to i32
    %c0_i32_9 = arith.constant 0 : i32
    %11 = arith.cmpi ne, %10, %c0_i32_9 : i32
    scf.if %11 {
      %c0_10 = arith.constant 0 : index
      %c0_11 = arith.constant 0 : index
      %12 = vector.load %arg6[%c0_10, %c0_11] : memref<16x32xf32, #tpu.memory_space<vmem>>, vector<16x32xf32>
      %13 = arith.truncf %12 : vector<16x32xf32> to vector<16x32xbf16>
      %c0_12 = arith.constant 0 : index
      %c0_13 = arith.constant 0 : index
      %14 = vector.load %arg5[%c0_12, %c0_13] : memref<16x32xbf16, #tpu.memory_space<vmem>>, vector<16x32xbf16>
      tpu.vector_store %arg5[%c0_12, %c0_13], %13 {strides = array<i32>} : memref<16x32xbf16, #tpu.memory_space<vmem>>, vector<16x32xbf16>,
    } else {
    }
    return
  }
  func.func @transform_0(%arg0: i32, %arg1: i32, %arg2: i32) -> (i32, i32) {
    %c0_i32 = arith.constant 0 : i32
    return %arg0, %arg2 : i32, i32
  }
  func.func @transform_1(%arg0: i32, %arg1: i32, %arg2: i32) -> (i32, i32) {
    %c0_i32 = arith.constant 0 : i32
    return %arg2, %arg1 : i32, i32
  }
  func.func @transform_2(%arg0: i32, %arg1: i32, %arg2: i32) -> (i32, i32) {
    %c0_i32 = arith.constant 0 : i32
    return %arg0, %arg1 : i32, i32
  }
}

module attributes {stable_mosaic.version = 11 : i64} {
  func.func @_linear_bias_kernel(%arg0: i32, %arg1: i32, %arg2: i32, %arg3: memref<16x32xbf16, #tpu.memory_space<vmem>>, %arg4: memref<32x32xbf16, #tpu.memory_space<vmem>>, %arg5: memref<1x32xf32, #tpu.memory_space<vmem>>, %arg6: memref<16x32xf32, #tpu.memory_space<vmem>>, %arg7: memref<16x32xf32, #tpu.memory_space<vmem>>) attributes {dimension_semantics = [#tpu.dimension_semantics<parallel>, #tpu.dimension_semantics<parallel>, #tpu.dimension_semantics<arbitrary>], iteration_bounds = array<i64: 1, 1, 1>, scalar_prefetch = 0 : i64, scratch_operands = 1 : i64, tpu.core_type = #tpu.core_type<tc>, window_params = [{transform_indices = @transform_0, window_bounds = array<i64: 16, 32>}, {transform_indices = @transform_1, window_bounds = array<i64: 32, 32>}, {transform_indices = @transform_2, window_bounds = array<i64: 1, 32>}, {transform_indices = @transform_3, window_bounds = array<i64: 16, 32>}]} {
    %c0_i32 = arith.constant 0 : i32
    %0 = arith.cmpi eq, %arg2, %c0_i32 : i32
    %1 = arith.extui %0 : i1 to i32
    %c0_i32_0 = arith.constant 0 : i32
    %2 = arith.cmpi ne, %1, %c0_i32_0 : i32
    scf.if %2 {
      %cst_10 = arith.constant 0.000000e+00 : f32
      %12 = vector.broadcast %cst_10 : f32 to vector<16x32xf32>
      %c0_11 = arith.constant 0 : index
      %c0_12 = arith.constant 0 : index
      %13 = vector.load %arg7[%c0_11, %c0_12] : memref<16x32xf32, #tpu.memory_space<vmem>>, vector<16x32xf32>
      tpu.vector_store %arg7[%c0_11, %c0_12], %12 {strides = array<i32>} : memref<16x32xf32, #tpu.memory_space<vmem>>, vector<16x32xf32>,
    } else {
    }
    %c0 = arith.constant 0 : index
    %c0_1 = arith.constant 0 : index
    %3 = vector.load %arg7[%c0, %c0_1] : memref<16x32xf32, #tpu.memory_space<vmem>>, vector<16x32xf32>
    %c0_2 = arith.constant 0 : index
    %c0_3 = arith.constant 0 : index
    %4 = vector.load %arg3[%c0_2, %c0_3] : memref<16x32xbf16, #tpu.memory_space<vmem>>, vector<16x32xbf16>
    %c0_4 = arith.constant 0 : index
    %c0_5 = arith.constant 0 : index
    %5 = vector.load %arg4[%c0_4, %c0_5] : memref<32x32xbf16, #tpu.memory_space<vmem>>, vector<32x32xbf16>
    %cst = arith.constant dense<0.000000e+00> : vector<16x32xf32>
    %6 = tpu.matmul %4, %5, %cst {dimension_numbers = #tpu.dot_dimension_numbers<[1], [0], [0], [1], [0, 0, 1, 1], [], []>} : vector<16x32xbf16>, vector<32x32xbf16>, vector<16x32xf32> -> vector<16x32xf32>
    %7 = arith.addf %3, %6 : vector<16x32xf32>
    %c0_6 = arith.constant 0 : index
    %c0_7 = arith.constant 0 : index
    %8 = vector.load %arg7[%c0_6, %c0_7] : memref<16x32xf32, #tpu.memory_space<vmem>>, vector<16x32xf32>
    tpu.vector_store %arg7[%c0_6, %c0_7], %7 {strides = array<i32>} : memref<16x32xf32, #tpu.memory_space<vmem>>, vector<16x32xf32>,
    %c0_i32_8 = arith.constant 0 : i32
    %9 = arith.cmpi eq, %arg2, %c0_i32_8 : i32
    %10 = arith.extui %9 : i1 to i32
    %c0_i32_9 = arith.constant 0 : i32
    %11 = arith.cmpi ne, %10, %c0_i32_9 : i32
    scf.if %11 {
      %c0_10 = arith.constant 0 : index
      %c0_11 = arith.constant 0 : index
      %12 = vector.load %arg7[%c0_10, %c0_11] : memref<16x32xf32, #tpu.memory_space<vmem>>, vector<16x32xf32>
      %c0_12 = arith.constant 0 : index
      %c0_13 = arith.constant 0 : index
      %13 = vector.load %arg5[%c0_12, %c0_13] : memref<1x32xf32, #tpu.memory_space<vmem>>, vector<1x32xf32>
      %14 = vector.broadcast %13 : vector<1x32xf32> to vector<16x32xf32>
      %15 = arith.addf %12, %14 : vector<16x32xf32>
      %c0_14 = arith.constant 0 : index
      %c0_15 = arith.constant 0 : index
      %16 = vector.load %arg6[%c0_14, %c0_15] : memref<16x32xf32, #tpu.memory_space<vmem>>, vector<16x32xf32>
      tpu.vector_store %arg6[%c0_14, %c0_15], %15 {strides = array<i32>} : memref<16x32xf32, #tpu.memory_space<vmem>>, vector<16x32xf32>,
    } else {
    }
    return
  }
  func.func @transform_0(%arg0: i32, %arg1: i32, %arg2: i32) -> (i32, i32) {
    %c0_i32 = arith.constant 0 : i32
    return %arg0, %arg2 : i32, i32
  }
  func.func @transform_1(%arg0: i32, %arg1: i32, %arg2: i32) -> (i32, i32) {
    %c0_i32 = arith.constant 0 : i32
    return %arg2, %arg1 : i32, i32
  }
  func.func @transform_2(%arg0: i32, %arg1: i32, %arg2: i32) -> (i32, i32) {
    %c0_i32 = arith.constant 0 : i32
    %c0_i32_0 = arith.constant 0 : i32
    return %c0_i32, %arg1 : i32, i32
  }
  func.func @transform_3(%arg0: i32, %arg1: i32, %arg2: i32) -> (i32, i32) {
    %c0_i32 = arith.constant 0 : i32
    return %arg0, %arg1 : i32, i32
  }
}

module attributes {stable_mosaic.version = 11 : i64} {
  func.func @kernel(%arg0: i32, %arg1: i32, %arg2: i32, %arg3: memref<1x8x32xbf16, #tpu.memory_space<vmem>>, %arg4: memref<1x8x32xbf16, #tpu.memory_space<vmem>>, %arg5: memref<1x8x32xbf16, #tpu.memory_space<vmem>>, %arg6: memref<1x8x32xbf16, #tpu.memory_space<vmem>>, %arg7: memref<2x8x1xf32, #tpu.memory_space<vmem>>, %arg8: memref<2x8x1xf32, #tpu.memory_space<vmem>>, %arg9: memref<2x8x16xf32, #tpu.memory_space<vmem>>) attributes {dimension_semantics = [#tpu.dimension_semantics<parallel>, #tpu.dimension_semantics<parallel>, #tpu.dimension_semantics<arbitrary>], iteration_bounds = array<i64: 2, 1, 1>, scalar_prefetch = 0 : i64, scratch_operands = 3 : i64, tpu.core_type = #tpu.core_type<tc>, window_params = [{transform_indices = @transform_0, window_bounds = array<i64: 1, 8, 32>}, {transform_indices = @transform_1, window_bounds = array<i64: 1, 8, 32>}, {transform_indices = @transform_2, window_bounds = array<i64: 1, 8, 32>}, {transform_indices = @transform_3, window_bounds = array<i64: 1, 8, 32>}]} {
    %c0_i32 = arith.constant 0 : i32
    %0 = arith.cmpi eq, %arg2, %c0_i32 : i32
    %1 = arith.extui %0 : i1 to i32
    %c0_i32_0 = arith.constant 0 : i32
    %2 = arith.cmpi ne, %1, %c0_i32_0 : i32
    scf.if %2 {
      %cst_53 = arith.constant 0xFF800000 : f32
      %84 = vector.broadcast %cst_53 : f32 to vector<2x8x1xf32>
      %c0_54 = arith.constant 0 : index
      %c0_55 = arith.constant 0 : index
      %c0_56 = arith.constant 0 : index
      %85 = vector.load %arg7[%c0_54, %c0_55, %c0_56] : memref<2x8x1xf32, #tpu.memory_space<vmem>>, vector<2x8x1xf32>
      tpu.vector_store %arg7[%c0_54, %c0_55, %c0_56], %84 {strides = array<i32>} : memref<2x8x1xf32, #tpu.memory_space<vmem>>, vector<2x8x1xf32>,
      %cst_57 = arith.constant 0.000000e+00 : f32
      %86 = vector.broadcast %cst_57 : f32 to vector<2x8x1xf32>
      %c0_58 = arith.constant 0 : index
      %c0_59 = arith.constant 0 : index
      %c0_60 = arith.constant 0 : index
      %87 = vector.load %arg8[%c0_58, %c0_59, %c0_60] : memref<2x8x1xf32, #tpu.memory_space<vmem>>, vector<2x8x1xf32>
      tpu.vector_store %arg8[%c0_58, %c0_59, %c0_60], %86 {strides = array<i32>} : memref<2x8x1xf32, #tpu.memory_space<vmem>>, vector<2x8x1xf32>,
      %cst_61 = arith.constant 0.000000e+00 : f32
      %88 = vector.broadcast %cst_61 : f32 to vector<2x8x16xf32>
      %c0_62 = arith.constant 0 : index
      %c0_63 = arith.constant 0 : index
      %c0_64 = arith.constant 0 : index
      %89 = vector.load %arg9[%c0_62, %c0_63, %c0_64] : memref<2x8x16xf32, #tpu.memory_space<vmem>>, vector<2x8x16xf32>
      tpu.vector_store %arg9[%c0_62, %c0_63, %c0_64], %88 {strides = array<i32>} : memref<2x8x16xf32, #tpu.memory_space<vmem>>, vector<2x8x16xf32>,
    } else {
    }
    %c0 = arith.constant 0 : index
    %c0_1 = arith.constant 0 : index
    %c0_2 = arith.constant 0 : index
    %3 = vector.load %arg3[%c0, %c0_1, %c0_2] : memref<1x8x32xbf16, #tpu.memory_space<vmem>>, vector<1x8x32xbf16>
    %4 = vector.shape_cast %3 : vector<1x8x32xbf16> to vector<8x32xbf16>
    %c0_3 = arith.constant 0 : index
    %c0_4 = arith.constant 0 : index
    %c0_5 = arith.constant 0 : index
    %5 = vector.load %arg4[%c0_3, %c0_4, %c0_5] : memref<1x8x32xbf16, #tpu.memory_space<vmem>>, vector<1x8x32xbf16>
    %6 = vector.shape_cast %5 : vector<1x8x32xbf16> to vector<8x32xbf16>
    %c0_6 = arith.constant 0 : index
    %c0_7 = arith.constant 0 : index
    %c0_8 = arith.constant 0 : index
    %7 = vector.load %arg5[%c0_6, %c0_7, %c0_8] : memref<1x8x32xbf16, #tpu.memory_space<vmem>>, vector<1x8x32xbf16>
    %8 = vector.shape_cast %7 : vector<1x8x32xbf16> to vector<8x32xbf16>
    %9 = vector.extract_strided_slice %4 {offsets = [0, 0], sizes = [8, 16], strides = [1, 1]} : vector<8x32xbf16> to vector<8x16xbf16>
    %10 = vector.extract_strided_slice %6 {offsets = [0, 0], sizes = [8, 16], strides = [1, 1]} : vector<8x32xbf16> to vector<8x16xbf16>
    %11 = vector.extract_strided_slice %8 {offsets = [0, 0], sizes = [8, 16], strides = [1, 1]} : vector<8x32xbf16> to vector<8x16xbf16>
    %cst = arith.constant dense<0.000000e+00> : vector<8x8xf32>
    %12 = tpu.matmul %9, %10, %cst {dimension_numbers = #tpu.dot_dimension_numbers<[1], [1], [0], [0], [0, 0, 1, 0], [], []>} : vector<8x16xbf16>, vector<8x16xbf16>, vector<8x8xf32> -> vector<8x8xf32>
    %c0_9 = arith.constant 0 : index
    %c0_10 = arith.constant 0 : index
    %c0_11 = arith.constant 0 : index
    %13 = vector.load %arg7[%c0_9, %c0_10, %c0_11] : memref<2x8x1xf32, #tpu.memory_space<vmem>>, vector<1x8x1xf32>
    %14 = vector.shape_cast %13 : vector<1x8x1xf32> to vector<8x1xf32>
    %cst_12 = arith.constant dense<0xFF800000> : vector<8xf32>
    %15 = vector.multi_reduction <maximumf>, %12, %cst_12 [1] : vector<8x8xf32> to vector<8xf32>
    %16 = vector.shape_cast %15 : vector<8xf32> to vector<8x1xf32>
    %17 = arith.maximumf %14, %16 : vector<8x1xf32>
    %18 = arith.subf %14, %17 : vector<8x1xf32>
    %19 = math.exp %18 : vector<8x1xf32>
    %20 = vector.broadcast %17 : vector<8x1xf32> to vector<8x8xf32>
    %21 = arith.subf %12, %20 : vector<8x8xf32>
    %22 = math.exp %21 : vector<8x8xf32>
    %c0_13 = arith.constant 0 : index
    %c0_14 = arith.constant 0 : index
    %c0_15 = arith.constant 0 : index
    %23 = vector.load %arg8[%c0_13, %c0_14, %c0_15] : memref<2x8x1xf32, #tpu.memory_space<vmem>>, vector<1x8x1xf32>
    %24 = vector.shape_cast %23 : vector<1x8x1xf32> to vector<8x1xf32>
    %25 = arith.mulf %19, %24 : vector<8x1xf32>
    %cst_16 = arith.constant dense<0.000000e+00> : vector<8xf32>
    %26 = vector.multi_reduction <add>, %22, %cst_16 [1] : vector<8x8xf32> to vector<8xf32>
    %27 = vector.shape_cast %26 : vector<8xf32> to vector<8x1xf32>
    %28 = arith.addf %25, %27 : vector<8x1xf32>
    %c0_17 = arith.constant 0 : index
    %c0_18 = arith.constant 0 : index
    %c0_19 = arith.constant 0 : index
    %29 = vector.load %arg8[%c0_17, %c0_18, %c0_19] : memref<2x8x1xf32, #tpu.memory_space<vmem>>, vector<1x8x1xf32>
    %30 = vector.shape_cast %29 : vector<1x8x1xf32> to vector<8x1xf32>
    %31 = vector.shape_cast %28 : vector<8x1xf32> to vector<1x8x1xf32>
    tpu.vector_store %arg8[%c0_17, %c0_18, %c0_19], %31 {strides = array<i32>} : memref<2x8x1xf32, #tpu.memory_space<vmem>>, vector<1x8x1xf32>,
    %32 = arith.truncf %22 : vector<8x8xf32> to vector<8x8xbf16>
    %cst_20 = arith.constant dense<0.000000e+00> : vector<8x16xf32>
    %33 = tpu.matmul %32, %11, %cst_20 {dimension_numbers = #tpu.dot_dimension_numbers<[1], [0], [0], [1], [0, 0, 1, 1], [], []>} : vector<8x8xbf16>, vector<8x16xbf16>, vector<8x16xf32> -> vector<8x16xf32>
    %c0_21 = arith.constant 0 : index
    %c0_22 = arith.constant 0 : index
    %c0_23 = arith.constant 0 : index
    %34 = vector.load %arg9[%c0_21, %c0_22, %c0_23] : memref<2x8x16xf32, #tpu.memory_space<vmem>>, vector<1x8x16xf32>
    %35 = vector.shape_cast %34 : vector<1x8x16xf32> to vector<8x16xf32>
    %36 = vector.broadcast %19 : vector<8x1xf32> to vector<8x16xf32>
    %37 = arith.mulf %36, %35 : vector<8x16xf32>
    %38 = arith.addf %37, %33 : vector<8x16xf32>
    %c0_24 = arith.constant 0 : index
    %c0_25 = arith.constant 0 : index
    %c0_26 = arith.constant 0 : index
    %39 = vector.load %arg9[%c0_24, %c0_25, %c0_26] : memref<2x8x16xf32, #tpu.memory_space<vmem>>, vector<1x8x16xf32>
    %40 = vector.shape_cast %39 : vector<1x8x16xf32> to vector<8x16xf32>
    %41 = vector.shape_cast %38 : vector<8x16xf32> to vector<1x8x16xf32>
    tpu.vector_store %arg9[%c0_24, %c0_25, %c0_26], %41 {strides = array<i32>} : memref<2x8x16xf32, #tpu.memory_space<vmem>>, vector<1x8x16xf32>,
    %c0_27 = arith.constant 0 : index
    %c0_28 = arith.constant 0 : index
    %c0_29 = arith.constant 0 : index
    %42 = vector.load %arg7[%c0_27, %c0_28, %c0_29] : memref<2x8x1xf32, #tpu.memory_space<vmem>>, vector<1x8x1xf32>
    %43 = vector.shape_cast %42 : vector<1x8x1xf32> to vector<8x1xf32>
    %44 = vector.shape_cast %17 : vector<8x1xf32> to vector<1x8x1xf32>
    tpu.vector_store %arg7[%c0_27, %c0_28, %c0_29], %44 {strides = array<i32>} : memref<2x8x1xf32, #tpu.memory_space<vmem>>, vector<1x8x1xf32>,
    %45 = vector.extract_strided_slice %4 {offsets = [0, 16], sizes = [8, 16], strides = [1, 1]} : vector<8x32xbf16> to vector<8x16xbf16>
    %46 = vector.extract_strided_slice %6 {offsets = [0, 16], sizes = [8, 16], strides = [1, 1]} : vector<8x32xbf16> to vector<8x16xbf16>
    %47 = vector.extract_strided_slice %8 {offsets = [0, 16], sizes = [8, 16], strides = [1, 1]} : vector<8x32xbf16> to vector<8x16xbf16>
    %cst_30 = arith.constant dense<0.000000e+00> : vector<8x8xf32>
    %48 = tpu.matmul %45, %46, %cst_30 {dimension_numbers = #tpu.dot_dimension_numbers<[1], [1], [0], [0], [0, 0, 1, 0], [], []>} : vector<8x16xbf16>, vector<8x16xbf16>, vector<8x8xf32> -> vector<8x8xf32>
    %c1 = arith.constant 1 : index
    %c0_31 = arith.constant 0 : index
    %c0_32 = arith.constant 0 : index
    %49 = vector.load %arg7[%c1, %c0_31, %c0_32] : memref<2x8x1xf32, #tpu.memory_space<vmem>>, vector<1x8x1xf32>
    %50 = vector.shape_cast %49 : vector<1x8x1xf32> to vector<8x1xf32>
    %cst_33 = arith.constant dense<0xFF800000> : vector<8xf32>
    %51 = vector.multi_reduction <maximumf>, %48, %cst_33 [1] : vector<8x8xf32> to vector<8xf32>
    %52 = vector.shape_cast %51 : vector<8xf32> to vector<8x1xf32>
    %53 = arith.maximumf %50, %52 : vector<8x1xf32>
    %54 = arith.subf %50, %53 : vector<8x1xf32>
    %55 = math.exp %54 : vector<8x1xf32>
    %56 = vector.broadcast %53 : vector<8x1xf32> to vector<8x8xf32>
    %57 = arith.subf %48, %56 : vector<8x8xf32>
    %58 = math.exp %57 : vector<8x8xf32>
    %c1_34 = arith.constant 1 : index
    %c0_35 = arith.constant 0 : index
    %c0_36 = arith.constant 0 : index
    %59 = vector.load %arg8[%c1_34, %c0_35, %c0_36] : memref<2x8x1xf32, #tpu.memory_space<vmem>>, vector<1x8x1xf32>
    %60 = vector.shape_cast %59 : vector<1x8x1xf32> to vector<8x1xf32>
    %61 = arith.mulf %55, %60 : vector<8x1xf32>
    %cst_37 = arith.constant dense<0.000000e+00> : vector<8xf32>
    %62 = vector.multi_reduction <add>, %58, %cst_37 [1] : vector<8x8xf32> to vector<8xf32>
    %63 = vector.shape_cast %62 : vector<8xf32> to vector<8x1xf32>
    %64 = arith.addf %61, %63 : vector<8x1xf32>
    %c1_38 = arith.constant 1 : index
    %c0_39 = arith.constant 0 : index
    %c0_40 = arith.constant 0 : index
    %65 = vector.load %arg8[%c1_38, %c0_39, %c0_40] : memref<2x8x1xf32, #tpu.memory_space<vmem>>, vector<1x8x1xf32>
    %66 = vector.shape_cast %65 : vector<1x8x1xf32> to vector<8x1xf32>
    %67 = vector.shape_cast %64 : vector<8x1xf32> to vector<1x8x1xf32>
    tpu.vector_store %arg8[%c1_38, %c0_39, %c0_40], %67 {strides = array<i32>} : memref<2x8x1xf32, #tpu.memory_space<vmem>>, vector<1x8x1xf32>,
    %68 = arith.truncf %58 : vector<8x8xf32> to vector<8x8xbf16>
    %cst_41 = arith.constant dense<0.000000e+00> : vector<8x16xf32>
    %69 = tpu.matmul %68, %47, %cst_41 {dimension_numbers = #tpu.dot_dimension_numbers<[1], [0], [0], [1], [0, 0, 1, 1], [], []>} : vector<8x8xbf16>, vector<8x16xbf16>, vector<8x16xf32> -> vector<8x16xf32>
    %c1_42 = arith.constant 1 : index
    %c0_43 = arith.constant 0 : index
    %c0_44 = arith.constant 0 : index
    %70 = vector.load %arg9[%c1_42, %c0_43, %c0_44] : memref<2x8x16xf32, #tpu.memory_space<vmem>>, vector<1x8x16xf32>
    %71 = vector.shape_cast %70 : vector<1x8x16xf32> to vector<8x16xf32>
    %72 = vector.broadcast %55 : vector<8x1xf32> to vector<8x16xf32>
    %73 = arith.mulf %72, %71 : vector<8x16xf32>
    %74 = arith.addf %73, %69 : vector<8x16xf32>
    %c1_45 = arith.constant 1 : index
    %c0_46 = arith.constant 0 : index
    %c0_47 = arith.constant 0 : index
    %75 = vector.load %arg9[%c1_45, %c0_46, %c0_47] : memref<2x8x16xf32, #tpu.memory_space<vmem>>, vector<1x8x16xf32>
    %76 = vector.shape_cast %75 : vector<1x8x16xf32> to vector<8x16xf32>
    %77 = vector.shape_cast %74 : vector<8x16xf32> to vector<1x8x16xf32>
    tpu.vector_store %arg9[%c1_45, %c0_46, %c0_47], %77 {strides = array<i32>} : memref<2x8x16xf32, #tpu.memory_space<vmem>>, vector<1x8x16xf32>,
    %c1_48 = arith.constant 1 : index
    %c0_49 = arith.constant 0 : index
    %c0_50 = arith.constant 0 : index
    %78 = vector.load %arg7[%c1_48, %c0_49, %c0_50] : memref<2x8x1xf32, #tpu.memory_space<vmem>>, vector<1x8x1xf32>
    %79 = vector.shape_cast %78 : vector<1x8x1xf32> to vector<8x1xf32>
    %80 = vector.shape_cast %53 : vector<8x1xf32> to vector<1x8x1xf32>
    tpu.vector_store %arg7[%c1_48, %c0_49, %c0_50], %80 {strides = array<i32>} : memref<2x8x1xf32, #tpu.memory_space<vmem>>, vector<1x8x1xf32>,
    %c0_i32_51 = arith.constant 0 : i32
    %81 = arith.cmpi eq, %arg2, %c0_i32_51 : i32
    %82 = arith.extui %81 : i1 to i32
    %c0_i32_52 = arith.constant 0 : i32
    %83 = arith.cmpi ne, %82, %c0_i32_52 : i32
    scf.if %83 {
      %c0_53 = arith.constant 0 : index
      %c0_54 = arith.constant 0 : index
      %c0_55 = arith.constant 0 : index
      %84 = vector.load %arg8[%c0_53, %c0_54, %c0_55] : memref<2x8x1xf32, #tpu.memory_space<vmem>>, vector<1x8x1xf32>
      %85 = vector.shape_cast %84 : vector<1x8x1xf32> to vector<8x1xf32>
      %86 = tpu.reciprocal %85 {approx = true} : vector<8x1xf32> -> vector<8x1xf32>
      %c0_56 = arith.constant 0 : index
      %c0_57 = arith.constant 0 : index
      %c0_58 = arith.constant 0 : index
      %87 = vector.load %arg9[%c0_56, %c0_57, %c0_58] : memref<2x8x16xf32, #tpu.memory_space<vmem>>, vector<1x8x16xf32>
      %88 = vector.shape_cast %87 : vector<1x8x16xf32> to vector<8x16xf32>
      %89 = vector.broadcast %86 : vector<8x1xf32> to vector<8x16xf32>
      %90 = arith.mulf %88, %89 : vector<8x16xf32>
      %91 = arith.truncf %90 : vector<8x16xf32> to vector<8x16xbf16>
      %c0_59 = arith.constant 0 : index
      %c0_60 = arith.constant 0 : index
      %c0_61 = arith.constant 0 : index
      %92 = vector.load %arg6[%c0_59, %c0_60, %c0_61] : memref<1x8x32xbf16, #tpu.memory_space<vmem>>, vector<1x8x16xbf16>
      %93 = vector.shape_cast %92 : vector<1x8x16xbf16> to vector<8x16xbf16>
      %94 = vector.shape_cast %91 : vector<8x16xbf16> to vector<1x8x16xbf16>
      tpu.vector_store %arg6[%c0_59, %c0_60, %c0_61], %94 {strides = array<i32>} : memref<1x8x32xbf16, #tpu.memory_space<vmem>>, vector<1x8x16xbf16>,
      %c1_62 = arith.constant 1 : index
      %c0_63 = arith.constant 0 : index
      %c0_64 = arith.constant 0 : index
      %95 = vector.load %arg8[%c1_62, %c0_63, %c0_64] : memref<2x8x1xf32, #tpu.memory_space<vmem>>, vector<1x8x1xf32>
      %96 = vector.shape_cast %95 : vector<1x8x1xf32> to vector<8x1xf32>
      %97 = tpu.reciprocal %96 {approx = true} : vector<8x1xf32> -> vector<8x1xf32>
      %c1_65 = arith.constant 1 : index
      %c0_66 = arith.constant 0 : index
      %c0_67 = arith.constant 0 : index
      %98 = vector.load %arg9[%c1_65, %c0_66, %c0_67] : memref<2x8x16xf32, #tpu.memory_space<vmem>>, vector<1x8x16xf32>
      %99 = vector.shape_cast %98 : vector<1x8x16xf32> to vector<8x16xf32>
      %100 = vector.broadcast %97 : vector<8x1xf32> to vector<8x16xf32>
      %101 = arith.mulf %99, %100 : vector<8x16xf32>
      %102 = arith.truncf %101 : vector<8x16xf32> to vector<8x16xbf16>
      %c0_68 = arith.constant 0 : index
      %c0_69 = arith.constant 0 : index
      %c16 = arith.constant 16 : index
      %103 = vector.load %arg6[%c0_68, %c0_69, %c16] : memref<1x8x32xbf16, #tpu.memory_space<vmem>>, vector<1x8x16xbf16>
      %104 = vector.shape_cast %103 : vector<1x8x16xbf16> to vector<8x16xbf16>
      %105 = vector.shape_cast %102 : vector<8x16xbf16> to vector<1x8x16xbf16>
      tpu.vector_store %arg6[%c0_68, %c0_69, %c16], %105 {strides = array<i32>} : memref<1x8x32xbf16, #tpu.memory_space<vmem>>, vector<1x8x16xbf16>,
    } else {
    }
    return
  }
  func.func @transform_0(%arg0: i32, %arg1: i32, %arg2: i32) -> (i32, i32, i32) {
    %c0_i32 = arith.constant 0 : i32
    %c0_i32_0 = arith.constant 0 : i32
    return %arg0, %arg1, %c0_i32 : i32, i32, i32
  }
  func.func @transform_1(%arg0: i32, %arg1: i32, %arg2: i32) -> (i32, i32, i32) {
    %c0_i32 = arith.constant 0 : i32
    %c0_i32_0 = arith.constant 0 : i32
    return %arg0, %arg2, %c0_i32 : i32, i32, i32
  }
  func.func @transform_2(%arg0: i32, %arg1: i32, %arg2: i32) -> (i32, i32, i32) {
    %c0_i32 = arith.constant 0 : i32
    %c0_i32_0 = arith.constant 0 : i32
    return %arg0, %arg2, %c0_i32 : i32, i32, i32
  }
  func.func @transform_3(%arg0: i32, %arg1: i32, %arg2: i32) -> (i32, i32, i32) {
    %c0_i32 = arith.constant 0 : i32
    %c0_i32_0 = arith.constant 0 : i32
    return %arg0, %arg1, %c0_i32 : i32, i32, i32
  }
}

</mosaic_0001>

<llo_original>
// kernel: _lambda_.5
$region0: #{_lambda_.5}
  #allocation0 [shape = 'u32[]', space=smem, size = 0x4, offset = 0x4, fixed_abs, tag = 'smem constant byte address 0x4 - core index']
  #allocation1 [shape = 'u32[144,128]{1,0:T(1,128)}', space=vmem, size = 0x12000, scoped, tag = 'internal scratch']
  #allocation2 [shape = 'f32[16,32]{1,0:T(8,128)}', space=vmem, size = 0x2000, scoped, tag = 'scratch operand']
  #allocation3 [shape = 'f32[16,32]{1,0:T(8,128)}', space=vmem, size = 0x2000, scoped, tag = 'scratch operand']
  %s0 = inlined_call_operand.vmem [shape: bf16[16,32], index: 0, kind: input, shape index: {}]
  %s1 = inlined_call_operand.vmem [shape: bf16[32,32], index: 1, kind: input, shape index: {}]
  %s2 = inlined_call_operand.vmem [shape: bf16[32,32], index: 2, kind: input, shape index: {}]
  %s3 = inlined_call_operand.vmem [shape: bf16[16,32], index: 3, kind: output, shape index: {0}]
  %s4 = inlined_call_operand.vmem [shape: bf16[16,32], index: 4, kind: output, shape index: {1}]
  %5 = xla_tuple %s3, %s4
  %s6 = sld [smem:[#allocation0]]
  $region38: #{_lambda_.5} parent=0
    _
  %s8 = ssub.s32 1, %s6
  %s9 = scalar_select 0, %s8, %s6
  // Predicated region
  $region2: #{_lambda_.5} parent=0 // pred_check
    _
  $region3: #{_lambda_.5} parent=0 // pred_check_branch
    %11 = sbr.rel (0) target = $region5
  $region4: #{_lambda_.5} parent=0 // pred_region
    _
  $region5: #{_lambda_.5} parent=0 // pred_fallthru
    _
  // Predicated region
  $region6: #{_lambda_.5} parent=0 // pred_check
    _
  $region7: #{_lambda_.5} parent=0 // pred_check_branch
    %13 = sbr.rel (0) target = $region9
  $region8: #{_lambda_.5} parent=0 // pred_region
    _
  $region9: #{_lambda_.5} parent=0 // pred_fallthru
    _
  // Predicated region
  $region10: #{_lambda_.5} parent=0 // pred_check
    _
  $region11: #{_lambda_.5} parent=0 // pred_check_branch
    %15 = sbr.rel (0) target = $region13
  $region12: #{_lambda_.5} parent=0 // pred_region
    _
  $region13: #{_lambda_.5} parent=0 // pred_fallthru
    _
  %p17 = scmp.eq.s32.totalorder 0, 0
  // Predicated region
  $region14: #{_lambda_.5} parent=0 // pred_check
    %p18 = pneg %p17
  $region15: #{_lambda_.5} parent=0 // pred_check_branch
    %20 = sbr.rel (%p18) target = $region17
  $region16: #{_lambda_.5} parent=0 // pred_region
    %vm21 = vcmask 261120
    %22 = vst.msk [vmem:[#allocation2] sm:$0xff] %vm21, 0.0
    %23 = vst.msk [vmem:[#allocation2 + $0x8] sm:$0xff] %vm21, 0.0
    %24 = vst.msk [vmem:[#allocation3] sm:$0xff] %vm21, 0.0
    %25 = vst.msk [vmem:[#allocation3 + $0x8] sm:$0xff] %vm21, 0.0
  $region17: #{_lambda_.5} parent=0 // pred_fallthru
    _
  %v26 = vld [vmem:[%s0] sm:$0xf]
  %v27 = vld [vmem:[%s0 + $0x4] sm:$0xf]
  %v28 = vld [vmem:[#allocation2] sm:$0xff]
  %v29 = vld [vmem:[#allocation2 + $0x8] sm:$0xff]
  %v30 = vld [vmem:[%s1] sm:$0xf]
  %v31 = vld [vmem:[%s1 + $0x4] sm:$0xf]
  %v32 = vld [vmem:[%s1 + $0x8] sm:$0xf]
  %v33 = vld [vmem:[%s1 + $0xc] sm:$0xf]
  %v36 = vunpack.c.l.b16 %v26
  %v37 = vunpack.c.l.b16 %v27
  %v38 = vpack.c.b16 %v37, %v36
  %v43 = vunpack.c.l.b16 %v30
  %v44 = vunpack.c.l.b16 %v31
  %v45 = vunpack.c.l.b16 %v32
  %v46 = vunpack.c.l.b16 %v33
  %v47 = vpack.c.b16 %v44, %v43
  %v48 = vpack.c.b16 %v46, %v45
  %vm51 = vcmask 261120
  %v53 = vsel %vm51, %v38, 0
  %55 = vmatprep.subr.bf16.mxu0 0
  %56 = vmatpush1.bf16.msra.mxu0 %v47
  %57 = vmatprep.subr.bf16.mxu0 0
  %58 = vmatpush1.bf16.msra.mxu0 %v48
  %59 = vmatprep.subr.bf16.mxu0 0
  %60 = vmatpush1.bf16.msra.mxu0 0
  %61 = vmatprep.subr.bf16.mxu0 0
  %62 = vmatpush1.bf16.msra.mxu0 0
  %63 = vmatprep.subr.bf16.mxu0 0
  %64 = vmatpush1.bf16.msra.mxu0 0
  %65 = vmatprep.subr.bf16.mxu0 0
  %66 = vmatpush1.bf16.msra.mxu0 0
  %67 = vmatprep.subr.bf16.mxu0 0
  %68 = vmatpush1.bf16.msra.mxu0 0
  %69 = vmatprep.subr.bf16.mxu0 0
  %70 = vmatpush1.bf16.msra.mxu0 0
  %71 = vmatprep.subr.bf16.mxu0 0
  %72 = vmatpush1.bf16.msra.mxu0 0
  %73 = vmatprep.subr.bf16.mxu0 0
  %74 = vmatpush1.bf16.msra.mxu0 0
  %75 = vmatprep.subr.bf16.mxu0 0
  %76 = vmatpush1.bf16.msra.mxu0 0
  %77 = vmatprep.subr.bf16.mxu0 0
  %78 = vmatpush1.bf16.msra.mxu0 0
  %79 = vmatprep.subr.bf16.mxu0 0
  %80 = vmatpush1.bf16.msra.mxu0 0
  %81 = vmatprep.subr.bf16.mxu0 0
  %82 = vmatpush1.bf16.msra.mxu0 0
  %83 = vmatprep.subr.bf16.mxu0 0
  %84 = vmatpush1.bf16.msra.mxu0 0
  %85 = vmatprep.subr.bf16.mxu0 0
  %86 = vmatpush1.bf16.msra.mxu0 0
  %87 = vmatprep.mubr.bf16.mxu0 0
  %88 = vmatmul.mubr.bf16.gmra.mrb[0].mxu0 %v53
  %v89 = vpop.f32.mrb[0].mxu0
  %v90 = vadd.f32 0.0, %v89
  %v91 = vpop.f32.mrb[0].mxu0
  %v92 = vpop.f32.mrb[0].mxu0
  %v93 = vadd.f32 0.0, %v92
  %v94 = vpop.f32.mrb[0].mxu0
  %95 = vdwg.mxu0
  %v96 = vadd.f32 %v28, %v90
  %v97 = vadd.f32 %v29, %v93
  %98 = vst.msk [vmem:[#allocation2] sm:$0xff] %vm51, %v96
  %99 = vst.msk [vmem:[#allocation2 + $0x8] sm:$0xff] %vm51, %v97
  %v100 = vld [vmem:[#allocation3] sm:$0xff]
  %v101 = vld [vmem:[#allocation3 + $0x8] sm:$0xff]
  %v102 = vld [vmem:[%s2] sm:$0xf]
  %v103 = vld [vmem:[%s2 + $0x4] sm:$0xf]
  %v104 = vld [vmem:[%s2 + $0x8] sm:$0xf]
  %v105 = vld [vmem:[%s2 + $0xc] sm:$0xf]
  %v110 = vunpack.c.l.b16 %v102
  %v111 = vunpack.c.l.b16 %v103
  %v112 = vunpack.c.l.b16 %v104
  %v113 = vunpack.c.l.b16 %v105
  %v114 = vpack.c.b16 %v111, %v110
  %v115 = vpack.c.b16 %v113, %v112
  %118 = vmatprep.subr.bf16.mxu0 0
  %119 = vmatpush1.bf16.msra.mxu0 %v114
  %120 = vmatprep.subr.bf16.mxu0 0
  %121 = vmatpush1.bf16.msra.mxu0 %v115
  %122 = vmatprep.subr.bf16.mxu0 0
  %123 = vmatpush1.bf16.msra.mxu0 0
  %124 = vmatprep.subr.bf16.mxu0 0
  %125 = vmatpush1.bf16.msra.mxu0 0
  %126 = vmatprep.subr.bf16.mxu0 0
  %127 = vmatpush1.bf16.msra.mxu0 0
  %128 = vmatprep.subr.bf16.mxu0 0
  %129 = vmatpush1.bf16.msra.mxu0 0
  %130 = vmatprep.subr.bf16.mxu0 0
  %131 = vmatpush1.bf16.msra.mxu0 0
  %132 = vmatprep.subr.bf16.mxu0 0
  %133 = vmatpush1.bf16.msra.mxu0 0
  %134 = vmatprep.subr.bf16.mxu0 0
  %135 = vmatpush1.bf16.msra.mxu0 0
  %136 = vmatprep.subr.bf16.mxu0 0
  %137 = vmatpush1.bf16.msra.mxu0 0
  %138 = vmatprep.subr.bf16.mxu0 0
  %139 = vmatpush1.bf16.msra.mxu0 0
  %140 = vmatprep.subr.bf16.mxu0 0
  %141 = vmatpush1.bf16.msra.mxu0 0
  %142 = vmatprep.subr.bf16.mxu0 0
  %143 = vmatpush1.bf16.msra.mxu0 0
  %144 = vmatprep.subr.bf16.mxu0 0
  %145 = vmatpush1.bf16.msra.mxu0 0
  %146 = vmatprep.subr.bf16.mxu0 0
  %147 = vmatpush1.bf16.msra.mxu0 0
  %148 = vmatprep.subr.bf16.mxu0 0
  %149 = vmatpush1.bf16.msra.mxu0 0
  %150 = vmatprep.mubr.bf16.mxu0 0
  %151 = vmatmul.mubr.bf16.gmra.mrb[0].mxu0 %v53
  %v152 = vpop.f32.mrb[0].mxu0
  %v153 = vadd.f32 0.0, %v152
  %v154 = vpop.f32.mrb[0].mxu0
  %v155 = vpop.f32.mrb[0].mxu0
  %v156 = vadd.f32 0.0, %v155
  %v157 = vpop.f32.mrb[0].mxu0
  %158 = vdwg.mxu0
  %v159 = vadd.f32 %v100, %v153
  %v160 = vadd.f32 %v101, %v156
  %161 = vst.msk [vmem:[#allocation3] sm:$0xff] %vm51, %v159
  %162 = vst.msk [vmem:[#allocation3 + $0x8] sm:$0xff] %vm51, %v160
  // Predicated region
  $region18: #{_lambda_.5} parent=0 // pred_check
    %p163 = pneg %p17
  $region19: #{_lambda_.5} parent=0 // pred_check_branch
    %165 = sbr.rel (%p163) target = $region21
  $region20: #{_lambda_.5} parent=0 // pred_region
    %v166 = vld [vmem:[#allocation2] sm:$0xff]
    %v167 = vld [vmem:[#allocation2 + $0x8] sm:$0xff]
    %v168 = vpack.c.bf16 %v167, %v166
    %v170 = vunpack.c.l.b16 %v168
    %v171 = vunpack.c.h.b16 %v168
    %v172 = vpack.c.b16 %v170, %v170
    %v173 = vpack.c.b16 %v171, %v171
    %vm176 = vcmask 257024
    %177 = vst.msk [vmem:[%s3] sm:$0xf] %vm176, %v172
    %178 = vst.msk [vmem:[%s3 + $0x4] sm:$0xf] %vm176, %v173
    %v179 = vld [vmem:[#allocation3] sm:$0xff]
    %v180 = vld [vmem:[#allocation3 + $0x8] sm:$0xff]
    %v181 = vpack.c.bf16 %v180, %v179
    %v183 = vunpack.c.l.b16 %v181
    %v184 = vunpack.c.h.b16 %v181
    %v185 = vpack.c.b16 %v183, %v183
    %v186 = vpack.c.b16 %v184, %v184
    %189 = vst.msk [vmem:[%s4] sm:$0xf] %vm176, %v185
    %190 = vst.msk [vmem:[%s4 + $0x4] sm:$0xf] %vm176, %v186
  $region21: #{_lambda_.5} parent=0 // pred_fallthru
    _
  // Predicated region
  $region22: #{_lambda_.5} parent=0 // pred_check
    _
  $region23: #{_lambda_.5} parent=0 // pred_check_branch
    %192 = sbr.rel (0) target = $region25
  $region24: #{_lambda_.5} parent=0 // pred_region
    _
  $region25: #{_lambda_.5} parent=0 // pred_fallthru
    _
  // Predicated region
  $region26: #{_lambda_.5} parent=0 // pred_check
    _
  $region27: #{_lambda_.5} parent=0 // pred_check_branch
    %194 = sbr.rel (0) target = $region29
  $region28: #{_lambda_.5} parent=0 // pred_region
    _
  $region29: #{_lambda_.5} parent=0 // pred_fallthru
    _
  // Predicated region
  $region30: #{_lambda_.5} parent=0 // pred_check
    _
  $region31: #{_lambda_.5} parent=0 // pred_check_branch
    %196 = sbr.rel (0) target = $region33
  $region32: #{_lambda_.5} parent=0 // pred_region
    _
  $region33: #{_lambda_.5} parent=0 // pred_fallthru
    _
  // Predicated region
  $region34: #{_lambda_.5} parent=0 // pred_check
    _
  $region35: #{_lambda_.5} parent=0 // pred_check_branch
    %198 = sbr.rel (0) target = $region37
  $region36: #{_lambda_.5} parent=0 // pred_region
    _
  $region37: #{_lambda_.5} parent=0 // pred_fallthru
    _

// kernel: _lambda_.4
$region0: #{_lambda_.4}
  #allocation0 [shape = 'u32[]', space=smem, size = 0x4, offset = 0x4, fixed_abs, tag = 'smem constant byte address 0x4 - core index']
  #allocation1 [shape = 'u32[144,128]{1,0:T(1,128)}', space=vmem, size = 0x12000, scoped, tag = 'internal scratch']
  #allocation2 [shape = 'f32[16,32]{1,0:T(8,128)}', space=vmem, size = 0x2000, scoped, tag = 'scratch operand']
  %s0 = inlined_call_operand.vmem [shape: bf16[16,32], index: 0, kind: input, shape index: {}]
  %s1 = inlined_call_operand.vmem [shape: bf16[32,32], index: 1, kind: input, shape index: {}]
  %s2 = inlined_call_operand.vmem [shape: bf16[16,32], index: 2, kind: output, shape index: {}]
  %s3 = sld [smem:[#allocation0]]
  $region26: #{_lambda_.4} parent=0
    _
  %s5 = ssub.s32 1, %s3
  %s6 = scalar_select 0, %s5, %s3
  // Predicated region
  $region2: #{_lambda_.4} parent=0 // pred_check
    _
  $region3: #{_lambda_.4} parent=0 // pred_check_branch
    %8 = sbr.rel (0) target = $region5
  $region4: #{_lambda_.4} parent=0 // pred_region
    _
  $region5: #{_lambda_.4} parent=0 // pred_fallthru
    _
  // Predicated region
  $region6: #{_lambda_.4} parent=0 // pred_check
    _
  $region7: #{_lambda_.4} parent=0 // pred_check_branch
    %10 = sbr.rel (0) target = $region9
  $region8: #{_lambda_.4} parent=0 // pred_region
    _
  $region9: #{_lambda_.4} parent=0 // pred_fallthru
    _
  %p12 = scmp.eq.s32.totalorder 0, 0
  // Predicated region
  $region10: #{_lambda_.4} parent=0 // pred_check
    %p13 = pneg %p12
  $region11: #{_lambda_.4} parent=0 // pred_check_branch
    %15 = sbr.rel (%p13) target = $region13
  $region12: #{_lambda_.4} parent=0 // pred_region
    %vm16 = vcmask 261120
    %17 = vst.msk [vmem:[#allocation2] sm:$0xff] %vm16, 0.0
    %18 = vst.msk [vmem:[#allocation2 + $0x8] sm:$0xff] %vm16, 0.0
  $region13: #{_lambda_.4} parent=0 // pred_fallthru
    _
  %v19 = vld [vmem:[#allocation2] sm:$0xff]
  %v20 = vld [vmem:[#allocation2 + $0x8] sm:$0xff]
  %v21 = vld [vmem:[%s0] sm:$0xf]
  %v22 = vld [vmem:[%s0 + $0x4] sm:$0xf]
  %v23 = vld [vmem:[%s1] sm:$0xf]
  %v24 = vld [vmem:[%s1 + $0x4] sm:$0xf]
  %v25 = vld [vmem:[%s1 + $0x8] sm:$0xf]
  %v26 = vld [vmem:[%s1 + $0xc] sm:$0xf]
  %v29 = vunpack.c.l.b16 %v21
  %v30 = vunpack.c.l.b16 %v22
  %v31 = vpack.c.b16 %v30, %v29
  %v36 = vunpack.c.l.b16 %v23
  %v37 = vunpack.c.l.b16 %v24
  %v38 = vunpack.c.l.b16 %v25
  %v39 = vunpack.c.l.b16 %v26
  %v40 = vpack.c.b16 %v37, %v36
  %v41 = vpack.c.b16 %v39, %v38
  %vm44 = vcmask 261120
  %v46 = vsel %vm44, %v31, 0
  %48 = vmatprep.subr.bf16.mxu0 0
  %49 = vmatpush1.bf16.msra.mxu0 %v40
  %50 = vmatprep.subr.bf16.mxu0 0
  %51 = vmatpush1.bf16.msra.mxu0 %v41
  %52 = vmatprep.subr.bf16.mxu0 0
  %53 = vmatpush1.bf16.msra.mxu0 0
  %54 = vmatprep.subr.bf16.mxu0 0
  %55 = vmatpush1.bf16.msra.mxu0 0
  %56 = vmatprep.subr.bf16.mxu0 0
  %57 = vmatpush1.bf16.msra.mxu0 0
  %58 = vmatprep.subr.bf16.mxu0 0
  %59 = vmatpush1.bf16.msra.mxu0 0
  %60 = vmatprep.subr.bf16.mxu0 0
  %61 = vmatpush1.bf16.msra.mxu0 0
  %62 = vmatprep.subr.bf16.mxu0 0
  %63 = vmatpush1.bf16.msra.mxu0 0
  %64 = vmatprep.subr.bf16.mxu0 0
  %65 = vmatpush1.bf16.msra.mxu0 0
  %66 = vmatprep.subr.bf16.mxu0 0
  %67 = vmatpush1.bf16.msra.mxu0 0
  %68 = vmatprep.subr.bf16.mxu0 0
  %69 = vmatpush1.bf16.msra.mxu0 0
  %70 = vmatprep.subr.bf16.mxu0 0
  %71 = vmatpush1.bf16.msra.mxu0 0
  %72 = vmatprep.subr.bf16.mxu0 0
  %73 = vmatpush1.bf16.msra.mxu0 0
  %74 = vmatprep.subr.bf16.mxu0 0
  %75 = vmatpush1.bf16.msra.mxu0 0
  %76 = vmatprep.subr.bf16.mxu0 0
  %77 = vmatpush1.bf16.msra.mxu0 0
  %78 = vmatprep.subr.bf16.mxu0 0
  %79 = vmatpush1.bf16.msra.mxu0 0
  %80 = vmatprep.mubr.bf16.mxu0 0
  %81 = vmatmul.mubr.bf16.gmra.mrb[0].mxu0 %v46
  %v82 = vpop.f32.mrb[0].mxu0
  %v83 = vadd.f32 0.0, %v82
  %v84 = vpop.f32.mrb[0].mxu0
  %v85 = vpop.f32.mrb[0].mxu0
  %v86 = vadd.f32 0.0, %v85
  %v87 = vpop.f32.mrb[0].mxu0
  %88 = vdwg.mxu0
  %v89 = vadd.f32 %v19, %v83
  %v90 = vadd.f32 %v20, %v86
  %91 = vst.msk [vmem:[#allocation2] sm:$0xff] %vm44, %v89
  %92 = vst.msk [vmem:[#allocation2 + $0x8] sm:$0xff] %vm44, %v90
  // Predicated region
  $region14: #{_lambda_.4} parent=0 // pred_check
    %p93 = pneg %p12
  $region15: #{_lambda_.4} parent=0 // pred_check_branch
    %95 = sbr.rel (%p93) target = $region17
  $region16: #{_lambda_.4} parent=0 // pred_region
    %v96 = vld [vmem:[#allocation2] sm:$0xff]
    %v97 = vld [vmem:[#allocation2 + $0x8] sm:$0xff]
    %v98 = vpack.c.bf16 %v97, %v96
    %v100 = vunpack.c.l.b16 %v98
    %v101 = vunpack.c.h.b16 %v98
    %v102 = vpack.c.b16 %v100, %v100
    %v103 = vpack.c.b16 %v101, %v101
    %vm106 = vcmask 257024
    %107 = vst.msk [vmem:[%s2] sm:$0xf] %vm106, %v102
    %108 = vst.msk [vmem:[%s2 + $0x4] sm:$0xf] %vm106, %v103
  $region17: #{_lambda_.4} parent=0 // pred_fallthru
    _
  // Predicated region
  $region18: #{_lambda_.4} parent=0 // pred_check
    _
  $region19: #{_lambda_.4} parent=0 // pred_check_branch
    %110 = sbr.rel (0) target = $region21
  $region20: #{_lambda_.4} parent=0 // pred_region
    _
  $region21: #{_lambda_.4} parent=0 // pred_fallthru
    _
  // Predicated region
  $region22: #{_lambda_.4} parent=0 // pred_check
    _
  $region23: #{_lambda_.4} parent=0 // pred_check_branch
    %112 = sbr.rel (0) target = $region25
  $region24: #{_lambda_.4} parent=0 // pred_region
    _
  $region25: #{_lambda_.4} parent=0 // pred_fallthru
    _

// kernel: _lambda_.7
$region0: #{_lambda_.7}
  #allocation0 [shape = 'u32[]', space=smem, size = 0x4, offset = 0x4, fixed_abs, tag = 'smem constant byte address 0x4 - core index']
  #allocation1 [shape = 'u32[144,128]{1,0:T(1,128)}', space=vmem, size = 0x12000, scoped, tag = 'internal scratch']
  #allocation2 [shape = 'f32[16,32]{1,0:T(8,128)}', space=vmem, size = 0x2000, scoped, tag = 'scratch operand']
  %s0 = inlined_call_operand.vmem [shape: bf16[16,32], index: 0, kind: input, shape index: {}]
  %s1 = inlined_call_operand.vmem [shape: bf16[32,32], index: 1, kind: input, shape index: {}]
  %s2 = inlined_call_operand.vmem [shape: f32[1,32], index: 2, kind: input, shape index: {}]
  %s3 = inlined_call_operand.hbm [shape: f32[16,32], index: 3, kind: output, shape index: {}]
  %s4 = sld [smem:[#allocation0]]
  $region30: #{_lambda_.7} parent=0
    _
  %s6 = ssub.s32 1, %s4
  %s7 = scalar_select 0, %s6, %s4
  $region1: #{_lambda_.7} parent=0
    #allocation3 [shape = 'u8[8192]{0}', space=vmem, size = 0x2000, scoped, tag = 'output window, operand 0, single buffered']
    #allocation4 [shape = 's32[1]{0}', space=sflag, size = 0x4, scoped, tag = 'scoped memory for _lambda_.7']
    %8 = vsyncpa [#allocation4], 0
    // Predicated region
    $region2: #{_lambda_.7} parent=1 // pred_check
      _
    $region3: #{_lambda_.7} parent=1 // pred_check_branch
      %10 = sbr.rel (0) target = $region5
    $region4: #{_lambda_.7} parent=1 // pred_region
      _
    $region5: #{_lambda_.7} parent=1 // pred_fallthru
      _
    // Predicated region
    $region6: #{_lambda_.7} parent=1 // pred_check
      _
    $region7: #{_lambda_.7} parent=1 // pred_check_branch
      %12 = sbr.rel (0) target = $region9
    $region8: #{_lambda_.7} parent=1 // pred_region
      _
    $region9: #{_lambda_.7} parent=1 // pred_fallthru
      _
    // Predicated region
    $region10: #{_lambda_.7} parent=1 // pred_check
      _
    $region11: #{_lambda_.7} parent=1 // pred_check_branch
      %14 = sbr.rel (0) target = $region13
    $region12: #{_lambda_.7} parent=1 // pred_region
      _
    $region13: #{_lambda_.7} parent=1 // pred_fallthru
      _
    %p16 = scmp.eq.s32.totalorder 0, 0
    // Predicated region
    $region14: #{_lambda_.7} parent=1 // pred_check
      %p17 = pneg %p16
    $region15: #{_lambda_.7} parent=1 // pred_check_branch
      %19 = sbr.rel (%p17) target = $region17
    $region16: #{_lambda_.7} parent=1 // pred_region
      %vm20 = vcmask 261120
      %21 = vst.msk [vmem:[#allocation2] sm:$0xff] %vm20, 0.0
      %22 = vst.msk [vmem:[#allocation2 + $0x8] sm:$0xff] %vm20, 0.0
    $region17: #{_lambda_.7} parent=1 // pred_fallthru
      _
    %v23 = vld [vmem:[#allocation2] sm:$0xff]
    %v24 = vld [vmem:[#allocation2 + $0x8] sm:$0xff]
    %v25 = vld [vmem:[%s0] sm:$0xf]
    %v26 = vld [vmem:[%s0 + $0x4] sm:$0xf]
    %v27 = vld [vmem:[%s1] sm:$0xf]
    %v28 = vld [vmem:[%s1 + $0x4] sm:$0xf]
    %v29 = vld [vmem:[%s1 + $0x8] sm:$0xf]
    %v30 = vld [vmem:[%s1 + $0xc] sm:$0xf]
    %v33 = vunpack.c.l.b16 %v25
    %v34 = vunpack.c.l.b16 %v26
    %v35 = vpack.c.b16 %v34, %v33
    %v40 = vunpack.c.l.b16 %v27
    %v41 = vunpack.c.l.b16 %v28
    %v42 = vunpack.c.l.b16 %v29
    %v43 = vunpack.c.l.b16 %v30
    %v44 = vpack.c.b16 %v41, %v40
    %v45 = vpack.c.b16 %v43, %v42
    %vm48 = vcmask 261120
    %v50 = vsel %vm48, %v35, 0
    %52 = vmatprep.subr.bf16.mxu0 0
    %53 = vmatpush1.bf16.msra.mxu0 %v44
    %54 = vmatprep.subr.bf16.mxu0 0
    %55 = vmatpush1.bf16.msra.mxu0 %v45
    %56 = vmatprep.subr.bf16.mxu0 0
    %57 = vmatpush1.bf16.msra.mxu0 0
    %58 = vmatprep.subr.bf16.mxu0 0
    %59 = vmatpush1.bf16.msra.mxu0 0
    %60 = vmatprep.subr.bf16.mxu0 0
    %61 = vmatpush1.bf16.msra.mxu0 0
    %62 = vmatprep.subr.bf16.mxu0 0
    %63 = vmatpush1.bf16.msra.mxu0 0
    %64 = vmatprep.subr.bf16.mxu0 0
    %65 = vmatpush1.bf16.msra.mxu0 0
    %66 = vmatprep.subr.bf16.mxu0 0
    %67 = vmatpush1.bf16.msra.mxu0 0
    %68 = vmatprep.subr.bf16.mxu0 0
    %69 = vmatpush1.bf16.msra.mxu0 0
    %70 = vmatprep.subr.bf16.mxu0 0
    %71 = vmatpush1.bf16.msra.mxu0 0
    %72 = vmatprep.subr.bf16.mxu0 0
    %73 = vmatpush1.bf16.msra.mxu0 0
    %74 = vmatprep.subr.bf16.mxu0 0
    %75 = vmatpush1.bf16.msra.mxu0 0
    %76 = vmatprep.subr.bf16.mxu0 0
    %77 = vmatpush1.bf16.msra.mxu0 0
    %78 = vmatprep.subr.bf16.mxu0 0
    %79 = vmatpush1.bf16.msra.mxu0 0
    %80 = vmatprep.subr.bf16.mxu0 0
    %81 = vmatpush1.bf16.msra.mxu0 0
    %82 = vmatprep.subr.bf16.mxu0 0
    %83 = vmatpush1.bf16.msra.mxu0 0
    %84 = vmatprep.mubr.bf16.mxu0 0
    %85 = vmatmul.mubr.bf16.gmra.mrb[0].mxu0 %v50
    %v86 = vpop.f32.mrb[0].mxu0
    %v87 = vadd.f32 0.0, %v86
    %v88 = vpop.f32.mrb[0].mxu0
    %v89 = vpop.f32.mrb[0].mxu0
    %v90 = vadd.f32 0.0, %v89
    %v91 = vpop.f32.mrb[0].mxu0
    %92 = vdwg.mxu0
    %v93 = vadd.f32 %v23, %v87
    %v94 = vadd.f32 %v24, %v90
    %95 = vst.msk [vmem:[#allocation2] sm:$0xff] %vm48, %v93
    %96 = vst.msk [vmem:[#allocation2 + $0x8] sm:$0xff] %vm48, %v94
    // Predicated region
    $region18: #{_lambda_.7} parent=1 // pred_check
      %p97 = pneg %p16
    $region19: #{_lambda_.7} parent=1 // pred_check_branch
      %99 = sbr.rel (%p97) target = $region21
    $region20: #{_lambda_.7} parent=1 // pred_region
      %v100 = vld [vmem:[#allocation2] sm:$0xff]
      %v101 = vld [vmem:[#allocation2 + $0x8] sm:$0xff]
      %v102 = vld [vmem:[%s2] sm:$0x1]
      %v104 = vlaneseq
      %v105 = vshrl.u32 %v104, 7
      %v106 = vsub.s32 0, %v105
      %v107 = vrot.slane %v102, %v106
      %v109 = vadd.f32 %v100, %v107
      %v110 = vadd.f32 %v101, %v107
      %111 = vst.msk [vmem:[#allocation3] sm:$0xff] %vm48, %v109
      %112 = vst.msk [vmem:[#allocation3 + $0x8] sm:$0xff] %vm48, %v110
    $region21: #{_lambda_.7} parent=1 // pred_fallthru
      _
    // Predicated region
    $region22: #{_lambda_.7} parent=1 // pred_check
      _
    $region23: #{_lambda_.7} parent=1 // pred_check_branch
      %114 = sbr.rel (0) target = $region25
    $region24: #{_lambda_.7} parent=1 // pred_region
      %s116 = ssub.s32 256, 256
      %117 = vsyncadd [#allocation4], %s116
      %s118 = sshll.u32 [#allocation3], 4
      %s119 = int_to_ptr.vmem [resolvable:$true] %s118
      %124 = dma.vmem_to_hbm [thread:$0]  %s119, 256, %s3, [#allocation4], 128, 128, 8
    $region25: #{_lambda_.7} parent=1 // pred_fallthru
      _
    // Predicated region
    $region26: #{_lambda_.7} parent=1 // pred_check
      _
    $region27: #{_lambda_.7} parent=1 // pred_check_branch
      %126 = sbr.rel (0) target = $region29
    $region28: #{_lambda_.7} parent=1 // pred_region
      %127 = dma.done [#allocation4], 256
    $region29: #{_lambda_.7} parent=1 // pred_fallthru
      _
    %128 = vsyncpa [#allocation4], 1

// kernel: _lambda_.6
$region0: #{_lambda_.6}
  #allocation0 [shape = 'u32[]', space=smem, size = 0x4, offset = 0x4, fixed_abs, tag = 'smem constant byte address 0x4 - core index']
  #allocation1 [shape = 'u32[144,128]{1,0:T(1,128)}', space=vmem, size = 0x12000, scoped, tag = 'internal scratch']
  #allocation2 [shape = 'f32[2,8,1]{2,1,0:T(8,128)}', space=vmem, size = 0x2000, scoped, tag = 'scratch operand']
  #allocation3 [shape = 'f32[2,8,1]{2,1,0:T(8,128)}', space=vmem, size = 0x2000, scoped, tag = 'scratch operand']
  #allocation4 [shape = 'f32[2,8,16]{2,1,0:T(8,128)}', space=vmem, size = 0x2000, scoped, tag = 'scratch operand']
  %s0 = inlined_call_operand.vmem [shape: bf16[2,8,32], index: 0, kind: input, shape index: {}]
  %s1 = inlined_call_operand.vmem [shape: bf16[2,8,32], index: 1, kind: input, shape index: {}]
  %s2 = inlined_call_operand.vmem [shape: bf16[2,8,32], index: 2, kind: input, shape index: {}]
  %s3 = inlined_call_operand.vmem [shape: bf16[2,8,32], index: 3, kind: output, shape index: {}]
  %s4 = sld [smem:[#allocation0]]
  $region53: #{_lambda_.6} parent=0
    _
  %s6 = ssub.s32 1, %s4
  %s7 = scalar_select 0, %s6, %s4
  loop: start=0, step=1, limit=4
  $region2: #{_lambda_.6} parent=0 // loop_pre_header
    _
  $region3: #{_lambda_.6} parent=0 // loop_header
    %s9 = sphi 0, %s13
    %p10 = scmp.ge.s32.totalorder %s9, 4
    %s16 = sphi 0, %s35
    %s17 = sphi 0, %s31
    %s18 = sphi 0, %s27
    %s19 = sphi 0, %s16
    %s20 = sphi 0, %s17
    %s21 = sphi 0, %s18
    %s22 = sphi 0, %s19
    %s23 = sphi 0, %s20
    %s24 = sphi 0, %s21
    %s40 = sphi 0, %s42
    %s43 = sphi 0, %s40
    %s44 = sphi 0, %s43
    %s60 = sphi 0, %s44
    %s68 = sphi 0, %s70
    %s71 = sphi 0, %s68
    %s72 = sphi 0, %s71
    %s88 = sphi 0, %s72
    %s96 = sphi 0, %s98
    %s99 = sphi 0, %s96
    %s100 = sphi 0, %s99
    %s116 = sphi 0, %s100
    %s124 = sphi 0, %s126
    %s127 = sphi 0, %s124
    %s128 = sphi 0, %s127
    %s144 = sphi 0, %s128
  $region4: #{_lambda_.6} parent=0 // loop_header_branch
    %12 = sbr.rel (%p10) target = $region8
  $region5: #{_lambda_.6} parent=0 // loop_body
    %s14 = ssub.s32 %s9, 1
    %s15 = ssub.s32 %s9, 2
    %s25 = sadd.s32 1, %s18
    %p26 = scmp.ge.s32.totalorder %s25, 1
    %s27 = scalar_select %p26, 0, %s25
    %s28 = sadd.s32 1, %s17
    %s29 = scalar_select %p26, %s28, %s17
    %p30 = scmp.ge.s32.totalorder %s29, 1
    %s31 = scalar_select %p30, 0, %s29
    %s32 = sadd.s32 1, %s16
    %s33 = scalar_select %p30, %s32, %s16
    %p34 = scmp.ge.s32.totalorder %s33, 2
    %s35 = scalar_select %p34, 0, %s33
    %s36 = ssub.s32 %s16, %s35
    %s37 = ssub.s32 %s17, %s31
    %s38 = sor.u32 %s36, %s37
    %p39 = scmp.eq.s32.totalorder %s38, 0
    %s41 = sadd.s32 %s40, 1
    %s42 = scalar_select %p39, %s40, %s41
    %p45 = pneg %p39
    %p46 = scmp.eq.s32.totalorder %s9, 1
    %p47 = por %p45, %p46
    %p48 = scmp.ne.s32.totalorder %s40, %s43
    %p49 = scmp.eq.s32.totalorder %s9, 0
    %p50 = por %p48, %p49
    %p51 = scmp.ne.s32.totalorder %s40, %s43
    %p52 = scmp.eq.s32.totalorder %s14, 1
    %p53 = por %p51, %p52
    %p54 = scmp.ne.s32.totalorder %s43, %s44
    %p55 = scmp.eq.s32.totalorder %s14, 0
    %p56 = por %p54, %p55
    %p57 = scmp.ne.s32.totalorder %s43, %s44
    %p58 = scmp.eq.s32.totalorder %s15, 1
    %p59 = por %p57, %p58
    %p61 = scmp.ne.s32.totalorder %s44, %s60
    %p62 = scmp.eq.s32.totalorder %s15, 0
    %p63 = por %p61, %p62
    %s64 = ssub.s32 %s16, %s35
    %s65 = ssub.s32 %s18, %s27
    %s66 = sor.u32 %s64, %s65
    %p67 = scmp.eq.s32.totalorder %s66, 0
    %s69 = sadd.s32 %s68, 1
    %s70 = scalar_select %p67, %s68, %s69
    %p73 = pneg %p67
    %p74 = scmp.eq.s32.totalorder %s9, 1
    %p75 = por %p73, %p74
    %p76 = scmp.ne.s32.totalorder %s68, %s71
    %p77 = scmp.eq.s32.totalorder %s9, 0
    %p78 = por %p76, %p77
    %p79 = scmp.ne.s32.totalorder %s68, %s71
    %p80 = scmp.eq.s32.totalorder %s14, 1
    %p81 = por %p79, %p80
    %p82 = scmp.ne.s32.totalorder %s71, %s72
    %p83 = scmp.eq.s32.totalorder %s14, 0
    %p84 = por %p82, %p83
    %p85 = scmp.ne.s32.totalorder %s71, %s72
    %p86 = scmp.eq.s32.totalorder %s15, 1
    %p87 = por %p85, %p86
    %p89 = scmp.ne.s32.totalorder %s72, %s88
    %p90 = scmp.eq.s32.totalorder %s15, 0
    %p91 = por %p89, %p90
    %s92 = ssub.s32 %s16, %s35
    %s93 = ssub.s32 %s18, %s27
    %s94 = sor.u32 %s92, %s93
    %p95 = scmp.eq.s32.totalorder %s94, 0
    %s97 = sadd.s32 %s96, 1
    %s98 = scalar_select %p95, %s96, %s97
    %p101 = pneg %p95
    %p102 = scmp.eq.s32.totalorder %s9, 1
    %p103 = por %p101, %p102
    %p104 = scmp.ne.s32.totalorder %s96, %s99
    %p105 = scmp.eq.s32.totalorder %s9, 0
    %p106 = por %p104, %p105
    %p107 = scmp.ne.s32.totalorder %s96, %s99
    %p108 = scmp.eq.s32.totalorder %s14, 1
    %p109 = por %p107, %p108
    %p110 = scmp.ne.s32.totalorder %s99, %s100
    %p111 = scmp.eq.s32.totalorder %s14, 0
    %p112 = por %p110, %p111
    %p113 = scmp.ne.s32.totalorder %s99, %s100
    %p114 = scmp.eq.s32.totalorder %s15, 1
    %p115 = por %p113, %p114
    %p117 = scmp.ne.s32.totalorder %s100, %s116
    %p118 = scmp.eq.s32.totalorder %s15, 0
    %p119 = por %p117, %p118
    %s120 = ssub.s32 %s16, %s35
    %s121 = ssub.s32 %s17, %s31
    %s122 = sor.u32 %s120, %s121
    %p123 = scmp.eq.s32.totalorder %s122, 0
    %s125 = sadd.s32 %s124, 1
    %s126 = scalar_select %p123, %s124, %s125
    %p129 = pneg %p123
    %p130 = scmp.eq.s32.totalorder %s9, 1
    %p131 = por %p129, %p130
    %p132 = scmp.ne.s32.totalorder %s124, %s127
    %p133 = scmp.eq.s32.totalorder %s9, 0
    %p134 = por %p132, %p133
    %p135 = scmp.ne.s32.totalorder %s124, %s127
    %p136 = scmp.eq.s32.totalorder %s14, 1
    %p137 = por %p135, %p136
    %p138 = scmp.ne.s32.totalorder %s127, %s128
    %p139 = scmp.eq.s32.totalorder %s14, 0
    %p140 = por %p138, %p139
    %p141 = scmp.ne.s32.totalorder %s127, %s128
    %p142 = scmp.eq.s32.totalorder %s15, 1
    %p143 = por %p141, %p142
    %p145 = scmp.ne.s32.totalorder %s128, %s144
    %p146 = scmp.eq.s32.totalorder %s15, 0
    %p147 = por %p145, %p146
    %p148 = scmp.le.s32.totalorder 1, %s9
    %p149 = scmp.lt.s32.totalorder %s9, 3
    %p150 = pnand %p148, %p149
    %p151 = pneg %p150
    // Predicated region
    $region9: #{_lambda_.6} parent=5 // pred_check
      _
    $region10: #{_lambda_.6} parent=5 // pred_check_branch
      %153 = sbr.rel (%p150) target = $region12
    $region11: #{_lambda_.6} parent=5 // pred_region
      %s154 = ssub.s32 %s9, 1
    $region12: #{_lambda_.6} parent=5 // pred_fallthru
      _
    %p155 = scmp.lt.s32.totalorder %s9, 2
    // Predicated region
    $region13: #{_lambda_.6} parent=5 // pred_check
      %p156 = pneg %p155
    $region14: #{_lambda_.6} parent=5 // pred_check_branch
      %158 = sbr.rel (%p156) target = $region16
    $region15: #{_lambda_.6} parent=5 // pred_region
      // Predicated region
      $region17: #{_lambda_.6} parent=15 // pred_check
        %p159 = pneg %p50
      $region18: #{_lambda_.6} parent=15 // pred_check_branch
        %161 = sbr.rel (%p159) target = $region20
      $region19: #{_lambda_.6} parent=15 // pred_region
        %p162 = scmp.lt.s32.totalorder %s16, 1
        %s163 = scalar_select %p162, %s16, 1
        %p164 = scmp.lt.s32.totalorder %s17, 0
        %s165 = scalar_select %p164, %s17, 0
        %s166 = sadd.s32 %s165, %s163
        %s167 = smul.addr %s166, 4
        %s168 = scalar_lea.vmem %s0, %s167
      $region20: #{_lambda_.6} parent=15 // pred_fallthru
        _
      // Predicated region
      $region21: #{_lambda_.6} parent=15 // pred_check
        %p169 = pneg %p78
      $region22: #{_lambda_.6} parent=15 // pred_check_branch
        %171 = sbr.rel (%p169) target = $region24
      $region23: #{_lambda_.6} parent=15 // pred_region
        %p172 = scmp.lt.s32.totalorder %s16, 1
        %s173 = scalar_select %p172, %s16, 1
        %p174 = scmp.lt.s32.totalorder %s18, 0
        %s175 = scalar_select %p174, %s18, 0
        %s176 = sadd.s32 %s175, %s173
        %s177 = smul.addr %s176, 4
        %s178 = scalar_lea.vmem %s1, %s177
      $region24: #{_lambda_.6} parent=15 // pred_fallthru
        _
      // Predicated region
      $region25: #{_lambda_.6} parent=15 // pred_check
        %p179 = pneg %p106
      $region26: #{_lambda_.6} parent=15 // pred_check_branch
        %181 = sbr.rel (%p179) target = $region28
      $region27: #{_lambda_.6} parent=15 // pred_region
        %p182 = scmp.lt.s32.totalorder %s16, 1
        %s183 = scalar_select %p182, %s16, 1
        %p184 = scmp.lt.s32.totalorder %s18, 0
        %s185 = scalar_select %p184, %s18, 0
        %s186 = sadd.s32 %s185, %s183
        %s187 = smul.addr %s186, 4
        %s188 = scalar_lea.vmem %s2, %s187
      $region28: #{_lambda_.6} parent=15 // pred_fallthru
        _
    $region16: #{_lambda_.6} parent=5 // pred_fallthru
      _
    %p189 = scmp.le.s32.totalorder 1, %s9
    %p190 = scmp.lt.s32.totalorder %s9, 3
    %p191 = pnand %p189, %p190
    %p192 = pneg %p191
    // Predicated region
    $region29: #{_lambda_.6} parent=5 // pred_check
      _
    $region30: #{_lambda_.6} parent=5 // pred_check_branch
      %194 = sbr.rel (%p191) target = $region32
    $region31: #{_lambda_.6} parent=5 // pred_region
      %s195 = ssub.s32 %s9, 1
      %p196 = scmp.lt.s32.totalorder %s19, 1
      %s197 = scalar_select %p196, %s19, 1
      %p198 = scmp.lt.s32.totalorder %s20, 0
      %s199 = scalar_select %p198, %s20, 0
      %s200 = sadd.s32 %s199, %s197
      %s201 = smul.addr %s200, 4
      %s202 = scalar_lea.vmem %s0, %s201
      %p203 = pneg %p56
      %p204 = pneg %p53
      %p205 = scmp.lt.s32.totalorder %s19, 1
      %s206 = scalar_select %p205, %s19, 1
      %p207 = scmp.lt.s32.totalorder %s21, 0
      %s208 = scalar_select %p207, %s21, 0
      %s209 = sadd.s32 %s208, %s206
      %s210 = smul.addr %s209, 4
      %s211 = scalar_lea.vmem %s1, %s210
      %p212 = pneg %p84
      %p213 = pneg %p81
      %p214 = scmp.lt.s32.totalorder %s19, 1
      %s215 = scalar_select %p214, %s19, 1
      %p216 = scmp.lt.s32.totalorder %s21, 0
      %s217 = scalar_select %p216, %s21, 0
      %s218 = sadd.s32 %s217, %s215
      %s219 = smul.addr %s218, 4
      %s220 = scalar_lea.vmem %s2, %s219
      %p221 = pneg %p112
      %p222 = pneg %p109
      %p223 = pneg %p140
      %p224 = pneg %p137
      %p225 = scmp.lt.s32.totalorder %s19, 1
      %s226 = scalar_select %p225, %s19, 1
      %p227 = scmp.lt.s32.totalorder %s20, 0
      %s228 = scalar_select %p227, %s20, 0
      %s229 = sadd.s32 %s228, %s226
      %s230 = smul.addr %s229, 4
      %s231 = scalar_lea.vmem %s3, %s230
      %p232 = scmp.lt.s32.totalorder %s19, 1
      %s233 = scalar_select %p232, %s19, 1
      %p234 = scmp.lt.s32.totalorder %s20, 0
      %s235 = scalar_select %p234, %s20, 0
      %s236 = sadd.s32 %s235, %s233
      %s237 = smul.addr %s236, 4
      %s238 = scalar_lea.vmem %s0, %s237
      %p239 = scmp.lt.s32.totalorder %s19, 1
      %s240 = scalar_select %p239, %s19, 1
      %p241 = scmp.lt.s32.totalorder %s21, 0
      %s242 = scalar_select %p241, %s21, 0
      %s243 = sadd.s32 %s242, %s240
      %s244 = smul.addr %s243, 4
      %s245 = scalar_lea.vmem %s1, %s244
      %p246 = scmp.lt.s32.totalorder %s19, 1
      %s247 = scalar_select %p246, %s19, 1
      %p248 = scmp.lt.s32.totalorder %s21, 0
      %s249 = scalar_select %p248, %s21, 0
      %s250 = sadd.s32 %s249, %s247
      %s251 = smul.addr %s250, 4
      %s252 = scalar_lea.vmem %s2, %s251
      %p253 = scmp.lt.s32.totalorder %s19, 1
      %s254 = scalar_select %p253, %s19, 1
      %p255 = scmp.lt.s32.totalorder %s20, 0
      %s256 = scalar_select %p255, %s20, 0
      %s257 = sadd.s32 %s256, %s254
      %s258 = smul.addr %s257, 4
      %s259 = scalar_lea.vmem %s3, %s258
      %p261 = scmp.eq.s32.totalorder %s21, 0
      // Predicated region
      $region33: #{_lambda_.6} parent=31 // pred_check
        %p262 = pneg %p261
      $region34: #{_lambda_.6} parent=31 // pred_check_branch
        %264 = sbr.rel (%p262) target = $region36
      $region35: #{_lambda_.6} parent=31 // pred_region
        %vm265 = vcmask 7168
        %266 = vst.msk [vmem:[#allocation2] sm:$0xff] %vm265, -inf
        %267 = vst.msk [vmem:[#allocation2 + $0x8] sm:$0xff] %vm265, -inf
        %268 = vst.msk [vmem:[#allocation3] sm:$0xff] %vm265, 0.0
        %269 = vst.msk [vmem:[#allocation3 + $0x8] sm:$0xff] %vm265, 0.0
        %vm270 = vcmask 130048
        %271 = vst.msk [vmem:[#allocation4] sm:$0xff] %vm270, 0.0
        %272 = vst.msk [vmem:[#allocation4 + $0x8] sm:$0xff] %vm270, 0.0
      $region36: #{_lambda_.6} parent=31 // pred_fallthru
        _
      %v273 = vld [vmem:[%s238] sm:$0xf]
      %v274 = vld [vmem:[%s245] sm:$0xf]
      %v275 = vld [vmem:[%s252] sm:$0xf]
      %vm276 = vcmask 130048
      %v278 = vsel %vm276, %v273, 0
      %v281 = vsel %vm276, %v274, 0
      %283 = vmatprep.subr.bf16.mxu0 0
      %284 = vmatpush1.bf16.xpose.msra.mxu0 %v281
      %285 = vmatprep.subr.bf16.mxu0 0
      %286 = vmatpush1.bf16.xpose.msra.mxu0 0
      %287 = vmatprep.subr.bf16.mxu0 0
      %288 = vmatpush1.bf16.xpose.msra.mxu0 0
      %289 = vmatprep.subr.bf16.mxu0 0
      %290 = vmatpush1.bf16.xpose.msra.mxu0 0
      %291 = vmatprep.subr.bf16.mxu0 0
      %292 = vmatpush1.bf16.xpose.msra.mxu0 0
      %293 = vmatprep.subr.bf16.mxu0 0
      %294 = vmatpush1.bf16.xpose.msra.mxu0 0
      %295 = vmatprep.subr.bf16.mxu0 0
      %296 = vmatpush1.bf16.xpose.msra.mxu0 0
      %297 = vmatprep.subr.bf16.mxu0 0
      %298 = vmatpush1.bf16.xpose.msra.mxu0 0
      %299 = vmatprep.subr.bf16.mxu0 0
      %300 = vmatpush1.bf16.xpose.msra.mxu0 0
      %301 = vmatprep.subr.bf16.mxu0 0
      %302 = vmatpush1.bf16.xpose.msra.mxu0 0
      %303 = vmatprep.subr.bf16.mxu0 0
      %304 = vmatpush1.bf16.xpose.msra.mxu0 0
      %305 = vmatprep.subr.bf16.mxu0 0
      %306 = vmatpush1.bf16.xpose.msra.mxu0 0
      %307 = vmatprep.subr.bf16.mxu0 0
      %308 = vmatpush1.bf16.xpose.msra.mxu0 0
      %309 = vmatprep.subr.bf16.mxu0 0
      %310 = vmatpush1.bf16.xpose.msra.mxu0 0
      %311 = vmatprep.subr.bf16.mxu0 0
      %312 = vmatpush1.bf16.xpose.msra.mxu0 0
      %313 = vmatprep.subr.bf16.mxu0 0
      %314 = vmatpush1.bf16.xpose.msra.mxu0 0
      %315 = vmatprep.mubr.bf16.mxu0 0
      %316 = vmatmul.mubr.bf16.gmra.mrb[0].mxu0 %v278
      %v317 = vpop.f32.mrb[0].mxu0
      %v318 = vadd.f32 0.0, %v317
      %v319 = vpop.f32.mrb[0].mxu0
      %v320 = vpop.f32.mrb[0].mxu0
      %v321 = vpop.f32.mrb[0].mxu0
      %322 = vdwg.mxu0
      %v323 = vld [vmem:[#allocation2] sm:$0xff]
      %vm324 = vcmask 64512
      %v325 = vsel %vm324, %v318, -inf
      %326 = vmax.xlane.f32.xlu0 %v325
      %v327 = vpop.xlane.xlu0 %326
      %v328 = vmax.f32 %v323, %v327
      %v329 = vsub.f32 %v323, %v328
      %v330 = vmul.f32 %v329, 1.442695
      %v331 = vpow.pop %v330
      %333 = vset.pattern.permute.xlu0 0
      %334 = vperm.xlu0 %333, %v328
      %v335 = vpop.permute.xlu0 %334
      %v337 = vsub.f32 %v318, %v335
      %v338 = vmul.f32 %v337, 1.442695
      %v339 = vpow.pop %v338
      %v340 = vld [vmem:[#allocation3] sm:$0xff]
      %v341 = vmul.f32 %v331, %v340
      %v342 = vsel %vm324, %v339, 0.0
      %343 = vadd.xlane.f32.xlu0 %v342
      %v344 = vpop.xlane.xlu0 %343
      %v345 = vadd.f32 %v341, %v344
      %vm346 = vcmask 7168
      %347 = vst.msk [vmem:[#allocation3] sm:$0xff] %vm346, %v345
      %v348 = vpack.c.bf16 %v339, %v339
      %v350 = vsel %vm324, %v348, 0
      %vm352 = vcmask 1043456
      %v354 = vsel %vm352, %v275, 0
      %356 = vmatprep.subr.bf16.mxu0 0
      %357 = vmatpush1.bf16.msra.mxu0 %v354
      %358 = vmatprep.subr.bf16.mxu0 0
      %359 = vmatpush1.bf16.msra.mxu0 0
      %360 = vmatprep.subr.bf16.mxu0 0
      %361 = vmatpush1.bf16.msra.mxu0 0
      %362 = vmatprep.subr.bf16.mxu0 0
      %363 = vmatpush1.bf16.msra.mxu0 0
      %364 = vmatprep.subr.bf16.mxu0 0
      %365 = vmatpush1.bf16.msra.mxu0 0
      %366 = vmatprep.subr.bf16.mxu0 0
      %367 = vmatpush1.bf16.msra.mxu0 0
      %368 = vmatprep.subr.bf16.mxu0 0
      %369 = vmatpush1.bf16.msra.mxu0 0
      %370 = vmatprep.subr.bf16.mxu0 0
      %371 = vmatpush1.bf16.msra.mxu0 0
      %372 = vmatprep.subr.bf16.mxu0 0
      %373 = vmatpush1.bf16.msra.mxu0 0
      %374 = vmatprep.subr.bf16.mxu0 0
      %375 = vmatpush1.bf16.msra.mxu0 0
      %376 = vmatprep.subr.bf16.mxu0 0
      %377 = vmatpush1.bf16.msra.mxu0 0
      %378 = vmatprep.subr.bf16.mxu0 0
      %379 = vmatpush1.bf16.msra.mxu0 0
      %380 = vmatprep.subr.bf16.mxu0 0
      %381 = vmatpush1.bf16.msra.mxu0 0
      %382 = vmatprep.subr.bf16.mxu0 0
      %383 = vmatpush1.bf16.msra.mxu0 0
      %384 = vmatprep.subr.bf16.mxu0 0
      %385 = vmatpush1.bf16.msra.mxu0 0
      %386 = vmatprep.subr.bf16.mxu0 0
      %387 = vmatpush1.bf16.msra.mxu0 0
      %388 = vmatprep.mubr.bf16.mxu0 0
      %389 = vmatmul.mubr.bf16.gmra.mrb[0].mxu0 %v350
      %v390 = vpop.f32.mrb[0].mxu0
      %v391 = vadd.f32 0.0, %v390
      %v392 = vpop.f32.mrb[0].mxu0
      %v393 = vpop.f32.mrb[0].mxu0
      %v394 = vpop.f32.mrb[0].mxu0
      %395 = vdwg.mxu0
      %v396 = vld [vmem:[#allocation4] sm:$0xff]
      %398 = vset.pattern.permute.xlu0 0
      %399 = vperm.xlu0 %398, %v331
      %v400 = vpop.permute.xlu0 %399
      %v402 = vmul.f32 %v400, %v396
      %v403 = vadd.f32 %v402, %v391
      %404 = vst.msk [vmem:[#allocation4] sm:$0xff] %vm276, %v403
      %405 = vst.msk [vmem:[#allocation2] sm:$0xff] %vm346, %v328
      %v407 = vunpack.c.l.b16 %v273
      %v408 = vpack.c.b16 %v407, %v407
      %409 = vrot.lane.b32.xlu0 %v408, 112
      %v410 = vpop.permute.xlu0 %409
      %v412 = vunpack.c.l.b16 %v274
      %v413 = vpack.c.b16 %v412, %v412
      %414 = vrot.lane.b32.xlu0 %v413, 112
      %v415 = vpop.permute.xlu0 %414
      %v417 = vsel %vm276, %v410, 0
      %v420 = vsel %vm276, %v415, 0
      %422 = vmatprep.subr.bf16.mxu0 0
      %423 = vmatpush1.bf16.xpose.msra.mxu0 %v420
      %424 = vmatprep.subr.bf16.mxu0 0
      %425 = vmatpush1.bf16.xpose.msra.mxu0 0
      %426 = vmatprep.subr.bf16.mxu0 0
      %427 = vmatpush1.bf16.xpose.msra.mxu0 0
      %428 = vmatprep.subr.bf16.mxu0 0
      %429 = vmatpush1.bf16.xpose.msra.mxu0 0
      %430 = vmatprep.subr.bf16.mxu0 0
      %431 = vmatpush1.bf16.xpose.msra.mxu0 0
      %432 = vmatprep.subr.bf16.mxu0 0
      %433 = vmatpush1.bf16.xpose.msra.mxu0 0
      %434 = vmatprep.subr.bf16.mxu0 0
      %435 = vmatpush1.bf16.xpose.msra.mxu0 0
      %436 = vmatprep.subr.bf16.mxu0 0
      %437 = vmatpush1.bf16.xpose.msra.mxu0 0
      %438 = vmatprep.subr.bf16.mxu0 0
      %439 = vmatpush1.bf16.xpose.msra.mxu0 0
      %440 = vmatprep.subr.bf16.mxu0 0
      %441 = vmatpush1.bf16.xpose.msra.mxu0 0
      %442 = vmatprep.subr.bf16.mxu0 0
      %443 = vmatpush1.bf16.xpose.msra.mxu0 0
      %444 = vmatprep.subr.bf16.mxu0 0
      %445 = vmatpush1.bf16.xpose.msra.mxu0 0
      %446 = vmatprep.subr.bf16.mxu0 0
      %447 = vmatpush1.bf16.xpose.msra.mxu0 0
      %448 = vmatprep.subr.bf16.mxu0 0
      %449 = vmatpush1.bf16.xpose.msra.mxu0 0
      %450 = vmatprep.subr.bf16.mxu0 0
      %451 = vmatpush1.bf16.xpose.msra.mxu0 0
      %452 = vmatprep.subr.bf16.mxu0 0
      %453 = vmatpush1.bf16.xpose.msra.mxu0 0
      %454 = vmatprep.mubr.bf16.mxu0 0
      %455 = vmatmul.mubr.bf16.gmra.mrb[0].mxu0 %v417
      %v456 = vpop.f32.mrb[0].mxu0
      %v457 = vadd.f32 0.0, %v456
      %v458 = vpop.f32.mrb[0].mxu0
      %v459 = vpop.f32.mrb[0].mxu0
      %v460 = vpop.f32.mrb[0].mxu0
      %461 = vdwg.mxu0
      %s462 = scalar_lea.vmem [#allocation2], 8
      %v463 = vld [vmem:[%s462] sm:$0xff]
      %v464 = vsel %vm324, %v457, -inf
      %465 = vmax.xlane.f32.xlu0 %v464
      %v466 = vpop.xlane.xlu0 %465
      %v467 = vmax.f32 %v463, %v466
      %v468 = vsub.f32 %v463, %v467
      %v469 = vmul.f32 %v468, 1.442695
      %v470 = vpow.pop %v469
      %472 = vset.pattern.permute.xlu0 0
      %473 = vperm.xlu0 %472, %v467
      %v474 = vpop.permute.xlu0 %473
      %v476 = vsub.f32 %v457, %v474
      %v477 = vmul.f32 %v476, 1.442695
      %v478 = vpow.pop %v477
      %s479 = scalar_lea.vmem [#allocation3], 8
      %v480 = vld [vmem:[%s479] sm:$0xff]
      %v481 = vmul.f32 %v470, %v480
      %v482 = vsel %vm324, %v478, 0.0
      %483 = vadd.xlane.f32.xlu0 %v482
      %v484 = vpop.xlane.xlu0 %483
      %v485 = vadd.f32 %v481, %v484
      %486 = vst.msk [vmem:[%s479] sm:$0xff] %vm346, %v485
      %v487 = vpack.c.bf16 %v478, %v478
      %v489 = vunpack.c.l.b16 %v275
      %v490 = vpack.c.b16 %v489, %v489
      %491 = vrot.lane.b32.xlu0 %v490, 112
      %v492 = vpop.permute.xlu0 %491
      %v494 = vsel %vm324, %v487, 0
      %v497 = vsel %vm352, %v492, 0
      %499 = vmatprep.subr.bf16.mxu0 0
      %500 = vmatpush1.bf16.msra.mxu0 %v497
      %501 = vmatprep.subr.bf16.mxu0 0
      %502 = vmatpush1.bf16.msra.mxu0 0
      %503 = vmatprep.subr.bf16.mxu0 0
      %504 = vmatpush1.bf16.msra.mxu0 0
      %505 = vmatprep.subr.bf16.mxu0 0
      %506 = vmatpush1.bf16.msra.mxu0 0
      %507 = vmatprep.subr.bf16.mxu0 0
      %508 = vmatpush1.bf16.msra.mxu0 0
      %509 = vmatprep.subr.bf16.mxu0 0
      %510 = vmatpush1.bf16.msra.mxu0 0
      %511 = vmatprep.subr.bf16.mxu0 0
      %512 = vmatpush1.bf16.msra.mxu0 0
      %513 = vmatprep.subr.bf16.mxu0 0
      %514 = vmatpush1.bf16.msra.mxu0 0
      %515 = vmatprep.subr.bf16.mxu0 0
      %516 = vmatpush1.bf16.msra.mxu0 0
      %517 = vmatprep.subr.bf16.mxu0 0
      %518 = vmatpush1.bf16.msra.mxu0 0
      %519 = vmatprep.subr.bf16.mxu0 0
      %520 = vmatpush1.bf16.msra.mxu0 0
      %521 = vmatprep.subr.bf16.mxu0 0
      %522 = vmatpush1.bf16.msra.mxu0 0
      %523 = vmatprep.subr.bf16.mxu0 0
      %524 = vmatpush1.bf16.msra.mxu0 0
      %525 = vmatprep.subr.bf16.mxu0 0
      %526 = vmatpush1.bf16.msra.mxu0 0
      %527 = vmatprep.subr.bf16.mxu0 0
      %528 = vmatpush1.bf16.msra.mxu0 0
      %529 = vmatprep.subr.bf16.mxu0 0
      %530 = vmatpush1.bf16.msra.mxu0 0
      %531 = vmatprep.mubr.bf16.mxu0 0
      %532 = vmatmul.mubr.bf16.gmra.mrb[0].mxu0 %v494
      %v533 = vpop.f32.mrb[0].mxu0
      %v534 = vadd.f32 0.0, %v533
      %v535 = vpop.f32.mrb[0].mxu0
      %v536 = vpop.f32.mrb[0].mxu0
      %v537 = vpop.f32.mrb[0].mxu0
      %538 = vdwg.mxu0
      %s539 = scalar_lea.vmem [#allocation4], 8
      %v540 = vld [vmem:[%s539] sm:$0xff]
      %542 = vset.pattern.permute.xlu0 0
      %543 = vperm.xlu0 %542, %v470
      %v544 = vpop.permute.xlu0 %543
      %v546 = vmul.f32 %v544, %v540
      %v547 = vadd.f32 %v546, %v534
      %548 = vst.msk [vmem:[%s539] sm:$0xff] %vm276, %v547
      %549 = vst.msk [vmem:[%s462] sm:$0xff] %vm346, %v467
      // Predicated region
      $region37: #{_lambda_.6} parent=31 // pred_check
        %p550 = pneg %p261
      $region38: #{_lambda_.6} parent=31 // pred_check_branch
        %552 = sbr.rel (%p550) target = $region40
      $region39: #{_lambda_.6} parent=31 // pred_region
        %v553 = vld [vmem:[#allocation3] sm:$0xff]
        %v554 = vrcp.pop %v553
        %v555 = vld [vmem:[#allocation4] sm:$0xff]
        %557 = vset.pattern.permute.xlu0 0
        %558 = vperm.xlu0 %557, %v554
        %v559 = vpop.permute.xlu0 %558
        %v561 = vmul.f32 %v555, %v559
        %v562 = vpack.c.bf16 %v561, %v561
        %vm563 = vcmask 125952
        %564 = vst.msk [vmem:[%s259] sm:$0xf] %vm563, %v562
        %v565 = vld [vmem:[%s479] sm:$0xff]
        %v566 = vrcp.pop %v565
        %v567 = vld [vmem:[%s539] sm:$0xff]
        %569 = vset.pattern.permute.xlu0 0
        %570 = vperm.xlu0 %569, %v566
        %v571 = vpop.permute.xlu0 %570
        %v573 = vmul.f32 %v567, %v571
        %v574 = vpack.c.bf16 %v573, %v573
        %v576 = vunpack.c.l.b16 %v574
        %v577 = vpack.c.b16 %v576, %v576
        %578 = vrot.lane.b32.xlu0 %v577, 16
        %v579 = vpop.permute.xlu0 %578
        %vm581 = vcmask 257152
        %582 = vst.msk [vmem:[%s259] sm:$0xf] %vm581, %v579
      $region40: #{_lambda_.6} parent=31 // pred_fallthru
        _
      %p583 = scmp.lt.s32.totalorder %s19, 1
      %s584 = scalar_select %p583, %s19, 1
      %p585 = scmp.lt.s32.totalorder %s20, 0
      %s586 = scalar_select %p585, %s20, 0
      %s587 = sadd.s32 %s586, %s584
      %s588 = smul.addr %s587, 4
      %s589 = scalar_lea.vmem %s3, %s588
      // Predicated region
      $region41: #{_lambda_.6} parent=31 // pred_check
        %p590 = pneg %p137
      $region42: #{_lambda_.6} parent=31 // pred_check_branch
        %592 = sbr.rel (%p590) target = $region44
      $region43: #{_lambda_.6} parent=31 // pred_region
        _
      $region44: #{_lambda_.6} parent=31 // pred_fallthru
        _
    $region32: #{_lambda_.6} parent=5 // pred_fallthru
      _
    %p593 = scmp.le.s32.totalorder 2, %s9
    // Predicated region
    $region45: #{_lambda_.6} parent=5 // pred_check
      %p594 = pneg %p593
    $region46: #{_lambda_.6} parent=5 // pred_check_branch
      %596 = sbr.rel (%p594) target = $region48
    $region47: #{_lambda_.6} parent=5 // pred_region
      %s597 = ssub.s32 %s9, 2
      // Predicated region
      $region49: #{_lambda_.6} parent=47 // pred_check
        %p598 = pneg %p143
      $region50: #{_lambda_.6} parent=47 // pred_check_branch
        %600 = sbr.rel (%p598) target = $region52
      $region51: #{_lambda_.6} parent=47 // pred_region
        %p601 = scmp.lt.s32.totalorder %s22, 1
        %s602 = scalar_select %p601, %s22, 1
        %p603 = scmp.lt.s32.totalorder %s23, 0
        %s604 = scalar_select %p603, %s23, 0
        %s605 = sadd.s32 %s604, %s602
        %s606 = smul.addr %s605, 4
        %s607 = scalar_lea.vmem %s3, %s606
      $region52: #{_lambda_.6} parent=47 // pred_fallthru
        _
    $region48: #{_lambda_.6} parent=5 // pred_fallthru
      _
  $region6: #{_lambda_.6} parent=0 // loop_footer
    %s13 = sadd.s32 1, %s9
  $region7: #{_lambda_.6} parent=0 // loop_footer_branch
    %8 = sbr.rel target = $region3
  $region8: #{_lambda_.6} parent=0 // loop_exit
    _

</llo_original>
